<compile_context>
chip_gen: v7x
topology: tpu7x:2x2x1
jax: 0.10.0
libtpu: 0.0.40
codegen_flags: <defaults>
</compile_context>

<pallas_src>
import numpy as np
import jax
import jax.numpy as jnp
from jax import lax
from jax.experimental import pallas as pl
from jax.experimental.pallas import tpu as pltpu

B, H, W = 2, 16, 128          # GT resolution
H2, W2 = H // 2, W // 2       # resolution of the network predictions
NUM_SUMS = 9                  # scalar reductions produced by the kernel
SUM_ROWS = 16                 # sublane-aligned row count of the sums block
NUM_OUT_CH = 7                # packed per-pixel output channels


def _bilinear_matrix(n_out, n_in):
    """align_corners=True bilinear resampling as an (n_out, n_in) matrix."""
    m = np.zeros((n_out, n_in), dtype=np.float32)
    if n_in == 1:
        m[:, 0] = 1.0
        return m
    src = np.arange(n_out, dtype=np.float64) * (n_in - 1) / max(n_out - 1, 1)
    i0 = np.clip(np.floor(src).astype(np.int64), 0, n_in - 1)
    i1 = np.clip(i0 + 1, 0, n_in - 1)
    w1 = (src - i0).astype(np.float32)
    w0 = 1.0 - w1
    m[np.arange(n_out), i0] += w0
    m[np.arange(n_out), i1] += w1
    return m


def _recip(x):
    """EUP approx reciprocal + one Newton step (~f32-exact, off the VALU divide path)."""
    inv = pl.reciprocal(x, approx=True)
    return inv * (2.0 - x * inv)


def _eval_kernel(gt_flow_ref, gt_flowm_ref, gt_disp_ref, gt_dispm_ref,
                 gt_disp2_ref, gt_disp2m_ref, preds_ref, whbd_ref, wwt_ref,
                 kp_ref, out_ref, sums_ref):
    f32 = jnp.float32
    bsz, h, w = gt_disp_ref.shape
    width = float(w)

    # pixel grid (u = column, v = row), as in self-mono-sf get_pixelgrid
    u = lax.broadcasted_iota(jnp.int32, (h, w), 1).astype(f32)
    v = lax.broadcasted_iota(jnp.int32, (h, w), 0).astype(f32)

    # ---- bilinear (align_corners=True) upsample of ALL B*4 prediction channels
    # with a single pair of MXU matmuls: W-interp then block-diagonal H-interp.
    tmp = jnp.dot(preds_ref[...], wwt_ref[...], preferred_element_type=f32)
    up = jnp.dot(whbd_ref[...], tmp, preferred_element_type=f32)

    row_sums = [jnp.zeros((1, w), f32) for _ in range(NUM_SUMS)]

    def _acc(i, plane):
        # streamed sublane (XLU) reduction; lane+final reduction finishes in JAX
        row_sums[i] = row_sums[i] + jnp.sum(plane, axis=0, keepdims=True)

    for b in range(bsz):                      # static unroll: batch folded
        fx = kp_ref[4 * b + 0]
        fy = kp_ref[4 * b + 1]
        cx = kp_ref[4 * b + 2]
        cy = kp_ref[4 * b + 3]
        fb = fx * 0.54                        # focal * baseline
        inv_fb = 1.0 / fb
        inv_fx = 1.0 / fx
        inv_fy = 1.0 / fy

        gt_fu = gt_flow_ref[2 * b]
        gt_fv = gt_flow_ref[2 * b + 1]
        fm = gt_flowm_ref[b] == 1.0
        gt_d = gt_disp_ref[b]
        dm = gt_dispm_ref[b] == 1.0
        gt_d2 = gt_disp2_ref[b]
        d2m = gt_disp2m_ref[b] == 1.0
        fm_f = fm.astype(f32)
        dm_f = dm.astype(f32)
        d2m_f = d2m.astype(f32)

        off = b * 4 * h
        out_disp = up[off:off + h, :] * width
        sfx = up[off + h:off + 2 * h, :]
        sfy = up[off + 2 * h:off + 3 * h, :]
        sfz = up[off + 3 * h:off + 4 * h, :]

        # ---- disparity 0 / depth 0 (disp2depth_kitti guard + clamp) -----------
        guard0 = jnp.where(out_disp > 0, 0.0, 1.0)          # 1 - (disp > 0)
        out_depth = jnp.clip(fb * _recip(out_disp + guard0), 0.001, 80.0)

        gt_den = gt_d + jnp.where(gt_d > 0, 0.0, 1.0)
        gt_depth = fb * _recip(gt_den)
        inv_gt_depth = gt_den * inv_fb                       # 1/gt_depth, algebraic

        d0_epe = jnp.abs(gt_d - out_disp) * dm_f
        d0_otl = dm & (d0_epe > 3.0) & (d0_epe > 0.05 * gt_d)
        diff = gt_depth - out_depth
        _acc(1, d0_otl.astype(f32))
        _acc(2, dm_f)
        _acc(3, jnp.abs(diff) * inv_gt_depth * dm_f)         # abs_rel numerator
        _acc(4, diff * diff * inv_gt_depth * dm_f)           # sq_rel numerator
        # TODO(synk): rms/log_rms/a1-a3 from compute_errors never reach the
        # module's returned loss_dict, so their reductions are omitted.

        # ---- sceneflow -> optical flow, pinhole K (zero skew, (0,0,1) row) ----
        pz = out_depth + sfz                                 # == zp == depth_next
        px = ((u - cx) * inv_fx) * out_depth + sfx
        py = ((v - cy) * inv_fy) * out_depth + sfy
        xp = fx * px + cx * pz
        yp = fy * py + cy * pz
        inv_z = _recip(pz + 1e-8)
        flow_u = xp * inv_z - u
        flow_v = yp * inv_z - v

        du = gt_fu - flow_u
        dv = gt_fv - flow_v
        f_epe = jnp.sqrt(du * du + dv * dv) * fm_f
        mag = jnp.sqrt(gt_fu * gt_fu + gt_fv * gt_fv) + 1e-8
        f_otl = fm & (f_epe > 3.0) & (f_epe > 0.05 * mag)
        _acc(5, f_epe)
        _acc(6, f_otl.astype(f32))

        # ---- disparity 1 (next frame); unguarded divide as in the reference ---
        out_depth_next = pz
        out_disp_next = fb * _recip(out_depth_next)
        d1_epe = jnp.abs(gt_d2 - out_disp_next) * d2m_f
        d1_otl = d2m & (d1_epe > 3.0) & (d1_epe > 0.05 * gt_d2)
        _acc(7, d1_otl.astype(f32))

        # ---- combined sceneflow outlier ---------------------------------------
        sf_mask = fm_f * dm_f * d2m_f
        otl_sf = (f_otl | d0_otl | d1_otl).astype(f32) * sf_mask
        _acc(0, sf_mask)
        _acc(8, otl_sf)

        # ---- packed per-pixel outputs (one lane-dense slab) --------------------
        o = b * NUM_OUT_CH
        out_ref[o + 0] = sf_mask
        out_ref[o + 1] = out_disp
        out_ref[o + 2] = out_depth
        out_ref[o + 3] = flow_u
        out_ref[o + 4] = flow_v
        out_ref[o + 5] = out_disp_next
        out_ref[o + 6] = out_depth_next

    pad = sums_ref.shape[0] - NUM_SUMS
    rows = row_sums + ([jnp.zeros((pad, w), f32)] if pad > 0 else [])
    sums_ref[...] = jnp.concatenate(rows, axis=0)


@jax.jit
def _run_kernel(gt_flow, gt_flow_mask, gt_disp, gt_disp_mask,
                gt_disp2, gt_disp2_mask, disp_pred, sf_pred, k_mat):
    b, _, h, w = gt_disp.shape
    _, _, h2, w2 = disp_pred.shape
    f32 = jnp.float32

    # interpolation operators (static, built with numpy at trace time)
    wh = _bilinear_matrix(h, h2)                                        # (H, H2)
    # TODO(synk): at real KITTI resolution, replace this (mostly-zero) block
    # diagonal with a per-channel dot_general + W-tiled grid (CORE_PARALLEL on v7x).
    whbd = jnp.asarray(np.kron(np.eye(b * 4, dtype=np.float32), wh))    # (B*4*H, B*4*H2)
    wwt = jnp.asarray(_bilinear_matrix(w, w2).T)                        # (W2, W)

    # pack the 4 low-res prediction channels into one input slab
    preds2d = jnp.concatenate([disp_pred, sf_pred], axis=1).reshape(b * 4 * h2, w2)

    # free leading-dim reshapes so every kernel ref is 3-D (one static index per plane)
    gt_flow3 = gt_flow.reshape(b * 2, h, w)
    gt_flowm3 = gt_flow_mask.reshape(b, h, w)
    gt_disp3 = gt_disp.reshape(b, h, w)
    gt_dispm3 = gt_disp_mask.reshape(b, h, w)
    gt_disp23 = gt_disp2.reshape(b, h, w)
    gt_disp2m3 = gt_disp2_mask.reshape(b, h, w)

    # pinhole intrinsics (zero skew, bottom row (0,0,1)): fx, fy, cx, cy per batch
    kparams = jnp.stack([k_mat[:, 0, 0], k_mat[:, 1, 1],
                         k_mat[:, 0, 2], k_mat[:, 1, 2]],
                        axis=1).reshape(-1).astype(f32)                 # (B*4,)

    full2 = lambda shape: pl.BlockSpec(shape, lambda i: (0, 0))
    full3 = lambda shape: pl.BlockSpec(shape, lambda i: (0, 0, 0))
    smem = pl.BlockSpec(memory_space=pltpu.MemorySpace.SMEM)

    out_shape = (jax.ShapeDtypeStruct((b * NUM_OUT_CH, h, w), f32),
                 jax.ShapeDtypeStruct((SUM_ROWS, w), f32))

    # advisory cost hint: tiny / latency dominated; help XLA overlap it.
    flops = (2 * (b * 4 * h2) * w2 * w
             + 2 * (b * 4 * h) * (b * 4 * h2) * w
             + 90 * b * h * w)
    bytes_accessed = 4 * (b * 7 * h * w                 # GT inputs
                          + b * 4 * h2 * w2             # predictions
                          + (b * 4 * h) * (b * 4 * h2) + w2 * w   # weights
                          + b * NUM_OUT_CH * h * w + SUM_ROWS * w  # outputs
                          + b * 4)
    cost = pl.CostEstimate(flops=flops, transcendentals=10 * b * h * w,
                           bytes_accessed=bytes_accessed)

    out_pack, sums = pl.pallas_call(
        _eval_kernel,
        out_shape=out_shape,
        grid=(1,),            # batch folded into one invocation (no per-step overhead)
        in_specs=[full3((b * 2, h, w)), full3((b, h, w)), full3((b, h, w)),
                  full3((b, h, w)), full3((b, h, w)), full3((b, h, w)),
                  full2((b * 4 * h2, w2)),
                  full2((b * 4 * h, b * 4 * h2)),
                  full2((w2, w)),
                  smem],
        out_specs=(full3((b * NUM_OUT_CH, h, w)), full2((SUM_ROWS, w))),
        compiler_params=pltpu.CompilerParams(
            dimension_semantics=("arbitrary",)),
        cost_estimate=cost,
    )(gt_flow3, gt_flowm3, gt_disp3, gt_dispm3, gt_disp23, gt_disp2m3,
      preds2d, whbd, wwt, kparams)

    out_pack = out_pack.reshape(b, NUM_OUT_CH, h, w)
    gt_sf_mask = out_pack[:, 0:1]
    out_disp = out_pack[:, 1:2]
    out_depth = out_pack[:, 2:3]
    out_flow = out_pack[:, 3:5]
    out_disp_next = out_pack[:, 5:6]
    out_depth_next = out_pack[:, 6:7]
    s = jnp.sum(sums[:NUM_SUMS, :], axis=1)     # finish the 9 reductions (lane sum)
    return (gt_sf_mask, out_disp, out_depth, out_flow,
            out_disp_next, out_depth_next, s)


def eval_sceneflow_kitti_train(output_dict, target_dict):
    """Forward pass of Eval_SceneFlow_KITTI_Train."""
    gt_disp = target_dict['target_disp']
    b, _, h, w = gt_disp.shape
    (gt_sf_mask, out_disp, out_depth, out_flow,
     out_disp_next, out_depth_next, s) = _run_kernel(
        target_dict['target_flow'], target_dict['target_flow_mask'],
        gt_disp, target_dict['target_disp_mask'],
        target_dict['target_disp2_occ'], target_dict['target_disp2_mask_occ'],
        output_dict['disp_l1_pp'][0], output_dict['flow_f_pp'][0],
        target_dict['input_k_l1'])

    numel = float(b * 1 * h * w)
    # NOTE: 91875.68 / 91873.4 are the reference module's KITTI normalization
    # constants; they are resolution-specific by construction of the reference.
    loss_dict = {
        'percentage_masked_sf': 100.0 * (1.0 - s[0] / numel),
        'd_abs': s[3] / s[2],                 # abs_rel over masked pixels
        'd_sq': s[4] / s[2],                  # sq_rel  over masked pixels
        'd1': (s[1] / b) / 91875.68,
        'f_epe': (s[5] / b) / 91875.68,
        'f1': (s[6] / b) / 91875.68,
        'd2': (s[7] / b) / 91875.68,
        'sf': (s[8] / b) / 91873.4,
    }
    output_dict['out_disp_l_pp'] = out_disp
    output_dict['out_depth_l_pp'] = out_depth
    output_dict['out_flow_pp'] = out_flow
    output_dict['out_disp_l_pp_next'] = out_disp_next
    output_dict['out_depth_l_pp_next'] = out_depth_next
    loss_dict_tensorboard = {}
    return loss_dict, loss_dict_tensorboard, gt_sf_mask


if __name__ == "__main__":
    key = jax.random.PRNGKey(0)
    ks = jax.random.split(key, 10)

    gt_flow = jax.random.normal(ks[0], (B, 2, H, W), jnp.float32) * 5.0
    flow_mask = (jax.random.uniform(ks[1], (B, 1, H, W)) > 0.2).astype(jnp.float32)
    disp_mask = (jax.random.uniform(ks[2], (B, 1, H, W)) > 0.3).astype(jnp.float32)
    gt_disp = jax.random.uniform(ks[3], (B, 1, H, W), minval=1.0, maxval=60.0) * disp_mask
    disp2_mask = (jax.random.uniform(ks[4], (B, 1, H, W)) > 0.3).astype(jnp.float32)
    gt_disp2 = jax.random.uniform(ks[5], (B, 1, H, W), minval=1.0, maxval=60.0) * disp2_mask

    disp_pred = jax.random.uniform(ks[6], (B, 1, H2, W2), minval=0.02, maxval=0.4)
    sf_pred = jax.random.normal(ks[7], (B, 3, H2, W2), jnp.float32) * 0.5

    fx = jnp.array([100.0, 120.0], jnp.float32)
    k_mat = jnp.stack([jnp.array([[fx[i], 0.0, W / 2.0],
                                  [0.0, fx[i], H / 2.0],
                                  [0.0, 0.0, 1.0]], jnp.float32) for i in range(B)])

    target_dict = {
        'target_flow': gt_flow,
        'target_flow_mask': flow_mask,
        'target_disp': gt_disp,
        'target_disp_mask': disp_mask,
        'target_disp2_occ': gt_disp2,
        'target_disp2_mask_occ': disp2_mask,
        'input_k_l1': k_mat,
    }
    output_dict = {'disp_l1_pp': [disp_pred], 'flow_f_pp': [sf_pred]}

    loss_dict, _, gt_sf_mask = eval_sceneflow_kitti_train(output_dict, target_dict)
    jax.block_until_ready(gt_sf_mask)
    for name, val in loss_dict.items():
        val = jax.block_until_ready(val)
        assert bool(jnp.all(jnp.isfinite(val))), f"non-finite loss {name}"
    print("KERNEL_OK")
</pallas_src>

<mosaic_0001>
module attributes {stable_mosaic.version = 11 : i64} {
  func.func @_eval_kernel(%arg0: i32, %arg1: memref<4x16x128xf32, #tpu.memory_space<vmem>>, %arg2: memref<2x16x128xf32, #tpu.memory_space<vmem>>, %arg3: memref<2x16x128xf32, #tpu.memory_space<vmem>>, %arg4: memref<2x16x128xf32, #tpu.memory_space<vmem>>, %arg5: memref<2x16x128xf32, #tpu.memory_space<vmem>>, %arg6: memref<2x16x128xf32, #tpu.memory_space<vmem>>, %arg7: memref<64x64xf32, #tpu.memory_space<vmem>>, %arg8: memref<128x64xf32, #tpu.memory_space<vmem>>, %arg9: memref<64x128xf32, #tpu.memory_space<vmem>>, %arg10: memref<8xf32, #tpu.memory_space<smem>>, %arg11: memref<14x16x128xf32, #tpu.memory_space<vmem>>, %arg12: memref<16x128xf32, #tpu.memory_space<vmem>>) attributes {dimension_semantics = [#tpu.dimension_semantics<arbitrary>], iteration_bounds = array<i64: 1>, scalar_prefetch = 0 : i64, scratch_operands = 0 : i64, tpu.core_type = #tpu.core_type<tc>, window_params = [{pipeline_mode = #tpu.pipeline_mode<synchronous>, transform_indices = @transform_0, window_bounds = array<i64: 4, 16, 128>}, {pipeline_mode = #tpu.pipeline_mode<synchronous>, transform_indices = @transform_1, window_bounds = array<i64: 2, 16, 128>}, {pipeline_mode = #tpu.pipeline_mode<synchronous>, transform_indices = @transform_2, window_bounds = array<i64: 2, 16, 128>}, {pipeline_mode = #tpu.pipeline_mode<synchronous>, transform_indices = @transform_3, window_bounds = array<i64: 2, 16, 128>}, {pipeline_mode = #tpu.pipeline_mode<synchronous>, transform_indices = @transform_4, window_bounds = array<i64: 2, 16, 128>}, {pipeline_mode = #tpu.pipeline_mode<synchronous>, transform_indices = @transform_5, window_bounds = array<i64: 2, 16, 128>}, {pipeline_mode = #tpu.pipeline_mode<synchronous>, transform_indices = @transform_6, window_bounds = array<i64: 64, 64>}, {pipeline_mode = #tpu.pipeline_mode<synchronous>, transform_indices = @transform_7, window_bounds = array<i64: 128, 64>}, {pipeline_mode = #tpu.pipeline_mode<synchronous>, transform_indices = @transform_8, window_bounds = array<i64: 64, 128>}, {transform_indices = @transform_9, window_bounds = array<i64: 8>}, {pipeline_mode = #tpu.pipeline_mode<synchronous>, transform_indices = @transform_10, window_bounds = array<i64: 14, 16, 128>}, {pipeline_mode = #tpu.pipeline_mode<synchronous>, transform_indices = @transform_11, window_bounds = array<i64: 16, 128>}]} {
    %0 = tpu.iota {dimensions = array<i32: 1>} : vector<16x128xi32>
    %1 = arith.sitofp %0 : vector<16x128xi32> to vector<16x128xf32>
    %2 = tpu.iota {dimensions = array<i32: 0>} : vector<16x128xi32>
    %3 = arith.sitofp %2 : vector<16x128xi32> to vector<16x128xf32>
    %c0 = arith.constant 0 : index
    %c0_0 = arith.constant 0 : index
    %4 = vector.load %arg7[%c0, %c0_0] : memref<64x64xf32, #tpu.memory_space<vmem>>, vector<64x64xf32>
    %c0_1 = arith.constant 0 : index
    %c0_2 = arith.constant 0 : index
    %5 = vector.load %arg9[%c0_1, %c0_2] : memref<64x128xf32, #tpu.memory_space<vmem>>, vector<64x128xf32>
    %cst = arith.constant dense<0.000000e+00> : vector<64x128xf32>
    %6 = tpu.matmul %4, %5, %cst {dimension_numbers = #tpu.dot_dimension_numbers<[1], [0], [0], [1], [0, 0, 1, 1], [], []>} : vector<64x64xf32>, vector<64x128xf32>, vector<64x128xf32> -> vector<64x128xf32>
    %c0_3 = arith.constant 0 : index
    %c0_4 = arith.constant 0 : index
    %7 = vector.load %arg8[%c0_3, %c0_4] : memref<128x64xf32, #tpu.memory_space<vmem>>, vector<128x64xf32>
    %cst_5 = arith.constant dense<0.000000e+00> : vector<128x128xf32>
    %8 = tpu.matmul %7, %6, %cst_5 {dimension_numbers = #tpu.dot_dimension_numbers<[1], [0], [0], [1], [0, 0, 1, 1], [], []>} : vector<128x64xf32>, vector<64x128xf32>, vector<128x128xf32> -> vector<128x128xf32>
    %cst_6 = arith.constant 0.000000e+00 : f32
    %9 = vector.broadcast %cst_6 : f32 to vector<1x128xf32>
    %cst_7 = arith.constant 0.000000e+00 : f32
    %10 = vector.broadcast %cst_7 : f32 to vector<1x128xf32>
    %cst_8 = arith.constant 0.000000e+00 : f32
    %11 = vector.broadcast %cst_8 : f32 to vector<1x128xf32>
    %cst_9 = arith.constant 0.000000e+00 : f32
    %12 = vector.broadcast %cst_9 : f32 to vector<1x128xf32>
    %cst_10 = arith.constant 0.000000e+00 : f32
    %13 = vector.broadcast %cst_10 : f32 to vector<1x128xf32>
    %cst_11 = arith.constant 0.000000e+00 : f32
    %14 = vector.broadcast %cst_11 : f32 to vector<1x128xf32>
    %cst_12 = arith.constant 0.000000e+00 : f32
    %15 = vector.broadcast %cst_12 : f32 to vector<1x128xf32>
    %cst_13 = arith.constant 0.000000e+00 : f32
    %16 = vector.broadcast %cst_13 : f32 to vector<1x128xf32>
    %cst_14 = arith.constant 0.000000e+00 : f32
    %17 = vector.broadcast %cst_14 : f32 to vector<1x128xf32>
    %c0_15 = arith.constant 0 : index
    %18 = memref.load %arg10[%c0_15] : memref<8xf32, #tpu.memory_space<smem>>
    %c1 = arith.constant 1 : index
    %19 = memref.load %arg10[%c1] : memref<8xf32, #tpu.memory_space<smem>>
    %c2 = arith.constant 2 : index
    %20 = memref.load %arg10[%c2] : memref<8xf32, #tpu.memory_space<smem>>
    %c3 = arith.constant 3 : index
    %21 = memref.load %arg10[%c3] : memref<8xf32, #tpu.memory_space<smem>>
    %cst_16 = arith.constant 5.400000e-01 : f32
    %22 = arith.mulf %18, %cst_16 : f32
    %cst_17 = arith.constant 1.000000e+00 : f32
    %23 = arith.divf %cst_17, %22 : f32
    %cst_18 = arith.constant 1.000000e+00 : f32
    %24 = arith.divf %cst_18, %18 : f32
    %cst_19 = arith.constant 1.000000e+00 : f32
    %25 = arith.divf %cst_19, %19 : f32
    %c0_20 = arith.constant 0 : index
    %c0_21 = arith.constant 0 : index
    %c0_22 = arith.constant 0 : index
    %26 = vector.load %arg1[%c0_20, %c0_21, %c0_22] : memref<4x16x128xf32, #tpu.memory_space<vmem>>, vector<1x16x128xf32>
    %27 = vector.shape_cast %26 : vector<1x16x128xf32> to vector<16x128xf32>
    %c1_23 = arith.constant 1 : index
    %c0_24 = arith.constant 0 : index
    %c0_25 = arith.constant 0 : index
    %28 = vector.load %arg1[%c1_23, %c0_24, %c0_25] : memref<4x16x128xf32, #tpu.memory_space<vmem>>, vector<1x16x128xf32>
    %29 = vector.shape_cast %28 : vector<1x16x128xf32> to vector<16x128xf32>
    %c0_26 = arith.constant 0 : index
    %c0_27 = arith.constant 0 : index
    %c0_28 = arith.constant 0 : index
    %30 = vector.load %arg2[%c0_26, %c0_27, %c0_28] : memref<2x16x128xf32, #tpu.memory_space<vmem>>, vector<1x16x128xf32>
    %31 = vector.shape_cast %30 : vector<1x16x128xf32> to vector<16x128xf32>
    %cst_29 = arith.constant 1.000000e+00 : f32
    %32 = vector.broadcast %cst_29 : f32 to vector<16x128xf32>
    %33 = arith.cmpf oeq, %31, %32 : vector<16x128xf32>
    %c0_30 = arith.constant 0 : index
    %c0_31 = arith.constant 0 : index
    %c0_32 = arith.constant 0 : index
    %34 = vector.load %arg3[%c0_30, %c0_31, %c0_32] : memref<2x16x128xf32, #tpu.memory_space<vmem>>, vector<1x16x128xf32>
    %35 = vector.shape_cast %34 : vector<1x16x128xf32> to vector<16x128xf32>
    %c0_33 = arith.constant 0 : index
    %c0_34 = arith.constant 0 : index
    %c0_35 = arith.constant 0 : index
    %36 = vector.load %arg4[%c0_33, %c0_34, %c0_35] : memref<2x16x128xf32, #tpu.memory_space<vmem>>, vector<1x16x128xf32>
    %37 = vector.shape_cast %36 : vector<1x16x128xf32> to vector<16x128xf32>
    %cst_36 = arith.constant 1.000000e+00 : f32
    %38 = vector.broadcast %cst_36 : f32 to vector<16x128xf32>
    %39 = arith.cmpf oeq, %37, %38 : vector<16x128xf32>
    %c0_37 = arith.constant 0 : index
    %c0_38 = arith.constant 0 : index
    %c0_39 = arith.constant 0 : index
    %40 = vector.load %arg5[%c0_37, %c0_38, %c0_39] : memref<2x16x128xf32, #tpu.memory_space<vmem>>, vector<1x16x128xf32>
    %41 = vector.shape_cast %40 : vector<1x16x128xf32> to vector<16x128xf32>
    %c0_40 = arith.constant 0 : index
    %c0_41 = arith.constant 0 : index
    %c0_42 = arith.constant 0 : index
    %42 = vector.load %arg6[%c0_40, %c0_41, %c0_42] : memref<2x16x128xf32, #tpu.memory_space<vmem>>, vector<1x16x128xf32>
    %43 = vector.shape_cast %42 : vector<1x16x128xf32> to vector<16x128xf32>
    %cst_43 = arith.constant 1.000000e+00 : f32
    %44 = vector.broadcast %cst_43 : f32 to vector<16x128xf32>
    %45 = arith.cmpf oeq, %43, %44 : vector<16x128xf32>
    %46 = arith.extui %33 : vector<16x128xi1> to vector<16x128xi32>
    %47 = arith.sitofp %46 : vector<16x128xi32> to vector<16x128xf32>
    %48 = arith.extui %39 : vector<16x128xi1> to vector<16x128xi32>
    %49 = arith.sitofp %48 : vector<16x128xi32> to vector<16x128xf32>
    %50 = arith.extui %45 : vector<16x128xi1> to vector<16x128xi32>
    %51 = arith.sitofp %50 : vector<16x128xi32> to vector<16x128xf32>
    %52 = vector.extract_strided_slice %8 {offsets = [0, 0], sizes = [16, 128], strides = [1, 1]} : vector<128x128xf32> to vector<16x128xf32>
    %cst_44 = arith.constant 1.280000e+02 : f32
    %53 = vector.broadcast %cst_44 : f32 to vector<16x128xf32>
    %54 = arith.mulf %52, %53 : vector<16x128xf32>
    %55 = vector.extract_strided_slice %8 {offsets = [16, 0], sizes = [16, 128], strides = [1, 1]} : vector<128x128xf32> to vector<16x128xf32>
    %56 = vector.extract_strided_slice %8 {offsets = [32, 0], sizes = [16, 128], strides = [1, 1]} : vector<128x128xf32> to vector<16x128xf32>
    %57 = vector.extract_strided_slice %8 {offsets = [48, 0], sizes = [16, 128], strides = [1, 1]} : vector<128x128xf32> to vector<16x128xf32>
    %cst_45 = arith.constant 0.000000e+00 : f32
    %58 = vector.broadcast %cst_45 : f32 to vector<16x128xf32>
    %59 = arith.cmpf ogt, %54, %58 : vector<16x128xf32>
    %cst_46 = arith.constant 0.000000e+00 : f32
    %cst_47 = arith.constant 1.000000e+00 : f32
    %60 = vector.broadcast %cst_46 : f32 to vector<16x128xf32>
    %61 = vector.broadcast %cst_47 : f32 to vector<16x128xf32>
    %62 = arith.select %59, %60, %61 : vector<16x128xi1>, vector<16x128xf32>
    %63 = arith.addf %54, %62 : vector<16x128xf32>
    %64 = tpu.reciprocal %63 {approx = true} : vector<16x128xf32> -> vector<16x128xf32>
    %65 = arith.mulf %63, %64 : vector<16x128xf32>
    %cst_48 = arith.constant 2.000000e+00 : f32
    %66 = vector.broadcast %cst_48 : f32 to vector<16x128xf32>
    %67 = arith.subf %66, %65 : vector<16x128xf32>
    %68 = arith.mulf %64, %67 : vector<16x128xf32>
    %69 = vector.broadcast %22 : f32 to vector<16x128xf32>
    %70 = arith.mulf %69, %68 : vector<16x128xf32>
    %cst_49 = arith.constant 1.000000e-03 : f32
    %cst_50 = arith.constant 8.000000e+01 : f32
    %71 = vector.broadcast %cst_49 : f32 to vector<16x128xf32>
    %72 = arith.maximumf %71, %70 : vector<16x128xf32>
    %73 = vector.broadcast %cst_50 : f32 to vector<16x128xf32>
    %74 = arith.minimumf %73, %72 : vector<16x128xf32>
    %cst_51 = arith.constant 0.000000e+00 : f32
    %75 = vector.broadcast %cst_51 : f32 to vector<16x128xf32>
    %76 = arith.cmpf ogt, %35, %75 : vector<16x128xf32>
    %cst_52 = arith.constant 0.000000e+00 : f32
    %cst_53 = arith.constant 1.000000e+00 : f32
    %77 = vector.broadcast %cst_52 : f32 to vector<16x128xf32>
    %78 = vector.broadcast %cst_53 : f32 to vector<16x128xf32>
    %79 = arith.select %76, %77, %78 : vector<16x128xi1>, vector<16x128xf32>
    %80 = arith.addf %35, %79 : vector<16x128xf32>
    %81 = tpu.reciprocal %80 {approx = true} : vector<16x128xf32> -> vector<16x128xf32>
    %82 = arith.mulf %80, %81 : vector<16x128xf32>
    %cst_54 = arith.constant 2.000000e+00 : f32
    %83 = vector.broadcast %cst_54 : f32 to vector<16x128xf32>
    %84 = arith.subf %83, %82 : vector<16x128xf32>
    %85 = arith.mulf %81, %84 : vector<16x128xf32>
    %86 = vector.broadcast %22 : f32 to vector<16x128xf32>
    %87 = arith.mulf %86, %85 : vector<16x128xf32>
    %88 = vector.broadcast %23 : f32 to vector<16x128xf32>
    %89 = arith.mulf %80, %88 : vector<16x128xf32>
    %90 = arith.subf %35, %54 : vector<16x128xf32>
    %91 = math.absf %90 : vector<16x128xf32>
    %92 = arith.mulf %91, %49 : vector<16x128xf32>
    %cst_55 = arith.constant 3.000000e+00 : f32
    %93 = vector.broadcast %cst_55 : f32 to vector<16x128xf32>
    %94 = arith.cmpf ogt, %92, %93 : vector<16x128xf32>
    %95 = arith.andi %39, %94 : vector<16x128xi1>
    %cst_56 = arith.constant 5.000000e-02 : f32
    %96 = vector.broadcast %cst_56 : f32 to vector<16x128xf32>
    %97 = arith.mulf %96, %35 : vector<16x128xf32>
    %98 = arith.cmpf ogt, %92, %97 : vector<16x128xf32>
    %99 = arith.andi %95, %98 : vector<16x128xi1>
    %100 = arith.subf %87, %74 : vector<16x128xf32>
    %101 = arith.extui %99 : vector<16x128xi1> to vector<16x128xi32>
    %102 = arith.sitofp %101 : vector<16x128xi32> to vector<16x128xf32>
    %cst_57 = arith.constant dense<0.000000e+00> : vector<128xf32>
    %103 = vector.multi_reduction <add>, %102, %cst_57 [0] : vector<16x128xf32> to vector<128xf32>
    %104 = vector.shape_cast %103 : vector<128xf32> to vector<1x128xf32>
    %105 = arith.addf %10, %104 : vector<1x128xf32>
    %cst_58 = arith.constant dense<0.000000e+00> : vector<128xf32>
    %106 = vector.multi_reduction <add>, %49, %cst_58 [0] : vector<16x128xf32> to vector<128xf32>
    %107 = vector.shape_cast %106 : vector<128xf32> to vector<1x128xf32>
    %108 = arith.addf %11, %107 : vector<1x128xf32>
    %109 = math.absf %100 : vector<16x128xf32>
    %110 = arith.mulf %109, %89 : vector<16x128xf32>
    %111 = arith.mulf %110, %49 : vector<16x128xf32>
    %cst_59 = arith.constant dense<0.000000e+00> : vector<128xf32>
    %112 = vector.multi_reduction <add>, %111, %cst_59 [0] : vector<16x128xf32> to vector<128xf32>
    %113 = vector.shape_cast %112 : vector<128xf32> to vector<1x128xf32>
    %114 = arith.addf %12, %113 : vector<1x128xf32>
    %115 = arith.mulf %100, %100 : vector<16x128xf32>
    %116 = arith.mulf %115, %89 : vector<16x128xf32>
    %117 = arith.mulf %116, %49 : vector<16x128xf32>
    %cst_60 = arith.constant dense<0.000000e+00> : vector<128xf32>
    %118 = vector.multi_reduction <add>, %117, %cst_60 [0] : vector<16x128xf32> to vector<128xf32>
    %119 = vector.shape_cast %118 : vector<128xf32> to vector<1x128xf32>
    %120 = arith.addf %13, %119 : vector<1x128xf32>
    %121 = arith.addf %74, %57 : vector<16x128xf32>
    %122 = vector.broadcast %20 : f32 to vector<16x128xf32>
    %123 = arith.subf %1, %122 : vector<16x128xf32>
    %124 = vector.broadcast %24 : f32 to vector<16x128xf32>
    %125 = arith.mulf %123, %124 : vector<16x128xf32>
    %126 = arith.mulf %125, %74 : vector<16x128xf32>
    %127 = arith.addf %126, %55 : vector<16x128xf32>
    %128 = vector.broadcast %21 : f32 to vector<16x128xf32>
    %129 = arith.subf %3, %128 : vector<16x128xf32>
    %130 = vector.broadcast %25 : f32 to vector<16x128xf32>
    %131 = arith.mulf %129, %130 : vector<16x128xf32>
    %132 = arith.mulf %131, %74 : vector<16x128xf32>
    %133 = arith.addf %132, %56 : vector<16x128xf32>
    %134 = vector.broadcast %18 : f32 to vector<16x128xf32>
    %135 = arith.mulf %134, %127 : vector<16x128xf32>
    %136 = vector.broadcast %20 : f32 to vector<16x128xf32>
    %137 = arith.mulf %136, %121 : vector<16x128xf32>
    %138 = arith.addf %135, %137 : vector<16x128xf32>
    %139 = vector.broadcast %19 : f32 to vector<16x128xf32>
    %140 = arith.mulf %139, %133 : vector<16x128xf32>
    %141 = vector.broadcast %21 : f32 to vector<16x128xf32>
    %142 = arith.mulf %141, %121 : vector<16x128xf32>
    %143 = arith.addf %140, %142 : vector<16x128xf32>
    %cst_61 = arith.constant 9.99999993E-9 : f32
    %144 = vector.broadcast %cst_61 : f32 to vector<16x128xf32>
    %145 = arith.addf %121, %144 : vector<16x128xf32>
    %146 = tpu.reciprocal %145 {approx = true} : vector<16x128xf32> -> vector<16x128xf32>
    %147 = arith.mulf %145, %146 : vector<16x128xf32>
    %cst_62 = arith.constant 2.000000e+00 : f32
    %148 = vector.broadcast %cst_62 : f32 to vector<16x128xf32>
    %149 = arith.subf %148, %147 : vector<16x128xf32>
    %150 = arith.mulf %146, %149 : vector<16x128xf32>
    %151 = arith.mulf %138, %150 : vector<16x128xf32>
    %152 = arith.subf %151, %1 : vector<16x128xf32>
    %153 = arith.mulf %143, %150 : vector<16x128xf32>
    %154 = arith.subf %153, %3 : vector<16x128xf32>
    %155 = arith.subf %27, %152 : vector<16x128xf32>
    %156 = arith.subf %29, %154 : vector<16x128xf32>
    %157 = arith.mulf %155, %155 : vector<16x128xf32>
    %158 = arith.mulf %156, %156 : vector<16x128xf32>
    %159 = arith.addf %157, %158 : vector<16x128xf32>
    %160 = math.sqrt %159 : vector<16x128xf32>
    %161 = arith.mulf %160, %47 : vector<16x128xf32>
    %162 = arith.mulf %27, %27 : vector<16x128xf32>
    %163 = arith.mulf %29, %29 : vector<16x128xf32>
    %164 = arith.addf %162, %163 : vector<16x128xf32>
    %165 = math.sqrt %164 : vector<16x128xf32>
    %cst_63 = arith.constant 9.99999993E-9 : f32
    %166 = vector.broadcast %cst_63 : f32 to vector<16x128xf32>
    %167 = arith.addf %165, %166 : vector<16x128xf32>
    %cst_64 = arith.constant 3.000000e+00 : f32
    %168 = vector.broadcast %cst_64 : f32 to vector<16x128xf32>
    %169 = arith.cmpf ogt, %161, %168 : vector<16x128xf32>
    %170 = arith.andi %33, %169 : vector<16x128xi1>
    %cst_65 = arith.constant 5.000000e-02 : f32
    %171 = vector.broadcast %cst_65 : f32 to vector<16x128xf32>
    %172 = arith.mulf %171, %167 : vector<16x128xf32>
    %173 = arith.cmpf ogt, %161, %172 : vector<16x128xf32>
    %174 = arith.andi %170, %173 : vector<16x128xi1>
    %cst_66 = arith.constant dense<0.000000e+00> : vector<128xf32>
    %175 = vector.multi_reduction <add>, %161, %cst_66 [0] : vector<16x128xf32> to vector<128xf32>
    %176 = vector.shape_cast %175 : vector<128xf32> to vector<1x128xf32>
    %177 = arith.addf %14, %176 : vector<1x128xf32>
    %178 = arith.extui %174 : vector<16x128xi1> to vector<16x128xi32>
    %179 = arith.sitofp %178 : vector<16x128xi32> to vector<16x128xf32>
    %cst_67 = arith.constant dense<0.000000e+00> : vector<128xf32>
    %180 = vector.multi_reduction <add>, %179, %cst_67 [0] : vector<16x128xf32> to vector<128xf32>
    %181 = vector.shape_cast %180 : vector<128xf32> to vector<1x128xf32>
    %182 = arith.addf %15, %181 : vector<1x128xf32>
    %183 = tpu.reciprocal %121 {approx = true} : vector<16x128xf32> -> vector<16x128xf32>
    %184 = arith.mulf %121, %183 : vector<16x128xf32>
    %cst_68 = arith.constant 2.000000e+00 : f32
    %185 = vector.broadcast %cst_68 : f32 to vector<16x128xf32>
    %186 = arith.subf %185, %184 : vector<16x128xf32>
    %187 = arith.mulf %183, %186 : vector<16x128xf32>
    %188 = vector.broadcast %22 : f32 to vector<16x128xf32>
    %189 = arith.mulf %188, %187 : vector<16x128xf32>
    %190 = arith.subf %41, %189 : vector<16x128xf32>
    %191 = math.absf %190 : vector<16x128xf32>
    %192 = arith.mulf %191, %51 : vector<16x128xf32>
    %cst_69 = arith.constant 3.000000e+00 : f32
    %193 = vector.broadcast %cst_69 : f32 to vector<16x128xf32>
    %194 = arith.cmpf ogt, %192, %193 : vector<16x128xf32>
    %195 = arith.andi %45, %194 : vector<16x128xi1>
    %cst_70 = arith.constant 5.000000e-02 : f32
    %196 = vector.broadcast %cst_70 : f32 to vector<16x128xf32>
    %197 = arith.mulf %196, %41 : vector<16x128xf32>
    %198 = arith.cmpf ogt, %192, %197 : vector<16x128xf32>
    %199 = arith.andi %195, %198 : vector<16x128xi1>
    %200 = arith.extui %199 : vector<16x128xi1> to vector<16x128xi32>
    %201 = arith.sitofp %200 : vector<16x128xi32> to vector<16x128xf32>
    %cst_71 = arith.constant dense<0.000000e+00> : vector<128xf32>
    %202 = vector.multi_reduction <add>, %201, %cst_71 [0] : vector<16x128xf32> to vector<128xf32>
    %203 = vector.shape_cast %202 : vector<128xf32> to vector<1x128xf32>
    %204 = arith.addf %16, %203 : vector<1x128xf32>
    %205 = arith.mulf %47, %49 : vector<16x128xf32>
    %206 = arith.mulf %205, %51 : vector<16x128xf32>
    %207 = arith.ori %174, %99 : vector<16x128xi1>
    %208 = arith.ori %207, %199 : vector<16x128xi1>
    %209 = arith.extui %208 : vector<16x128xi1> to vector<16x128xi32>
    %210 = arith.sitofp %209 : vector<16x128xi32> to vector<16x128xf32>
    %211 = arith.mulf %210, %206 : vector<16x128xf32>
    %cst_72 = arith.constant dense<0.000000e+00> : vector<128xf32>
    %212 = vector.multi_reduction <add>, %206, %cst_72 [0] : vector<16x128xf32> to vector<128xf32>
    %213 = vector.shape_cast %212 : vector<128xf32> to vector<1x128xf32>
    %214 = arith.addf %9, %213 : vector<1x128xf32>
    %cst_73 = arith.constant dense<0.000000e+00> : vector<128xf32>
    %215 = vector.multi_reduction <add>, %211, %cst_73 [0] : vector<16x128xf32> to vector<128xf32>
    %216 = vector.shape_cast %215 : vector<128xf32> to vector<1x128xf32>
    %217 = arith.addf %17, %216 : vector<1x128xf32>
    %c0_74 = arith.constant 0 : index
    %c0_75 = arith.constant 0 : index
    %c0_76 = arith.constant 0 : index
    %218 = vector.load %arg11[%c0_74, %c0_75, %c0_76] : memref<14x16x128xf32, #tpu.memory_space<vmem>>, vector<1x16x128xf32>
    %219 = vector.shape_cast %218 : vector<1x16x128xf32> to vector<16x128xf32>
    %220 = vector.shape_cast %206 : vector<16x128xf32> to vector<1x16x128xf32>
    tpu.vector_store %arg11[%c0_74, %c0_75, %c0_76], %220 {strides = array<i32>} : memref<14x16x128xf32, #tpu.memory_space<vmem>>, vector<1x16x128xf32>,
    %c1_77 = arith.constant 1 : index
    %c0_78 = arith.constant 0 : index
    %c0_79 = arith.constant 0 : index
    %221 = vector.load %arg11[%c1_77, %c0_78, %c0_79] : memref<14x16x128xf32, #tpu.memory_space<vmem>>, vector<1x16x128xf32>
    %222 = vector.shape_cast %221 : vector<1x16x128xf32> to vector<16x128xf32>
    %223 = vector.shape_cast %54 : vector<16x128xf32> to vector<1x16x128xf32>
    tpu.vector_store %arg11[%c1_77, %c0_78, %c0_79], %223 {strides = array<i32>} : memref<14x16x128xf32, #tpu.memory_space<vmem>>, vector<1x16x128xf32>,
    %c2_80 = arith.constant 2 : index
    %c0_81 = arith.constant 0 : index
    %c0_82 = arith.constant 0 : index
    %224 = vector.load %arg11[%c2_80, %c0_81, %c0_82] : memref<14x16x128xf32, #tpu.memory_space<vmem>>, vector<1x16x128xf32>
    %225 = vector.shape_cast %224 : vector<1x16x128xf32> to vector<16x128xf32>
    %226 = vector.shape_cast %74 : vector<16x128xf32> to vector<1x16x128xf32>
    tpu.vector_store %arg11[%c2_80, %c0_81, %c0_82], %226 {strides = array<i32>} : memref<14x16x128xf32, #tpu.memory_space<vmem>>, vector<1x16x128xf32>,
    %c3_83 = arith.constant 3 : index
    %c0_84 = arith.constant 0 : index
    %c0_85 = arith.constant 0 : index
    %227 = vector.load %arg11[%c3_83, %c0_84, %c0_85] : memref<14x16x128xf32, #tpu.memory_space<vmem>>, vector<1x16x128xf32>
    %228 = vector.shape_cast %227 : vector<1x16x128xf32> to vector<16x128xf32>
    %229 = vector.shape_cast %152 : vector<16x128xf32> to vector<1x16x128xf32>
    tpu.vector_store %arg11[%c3_83, %c0_84, %c0_85], %229 {strides = array<i32>} : memref<14x16x128xf32, #tpu.memory_space<vmem>>, vector<1x16x128xf32>,
    %c4 = arith.constant 4 : index
    %c0_86 = arith.constant 0 : index
    %c0_87 = arith.constant 0 : index
    %230 = vector.load %arg11[%c4, %c0_86, %c0_87] : memref<14x16x128xf32, #tpu.memory_space<vmem>>, vector<1x16x128xf32>
    %231 = vector.shape_cast %230 : vector<1x16x128xf32> to vector<16x128xf32>
    %232 = vector.shape_cast %154 : vector<16x128xf32> to vector<1x16x128xf32>
    tpu.vector_store %arg11[%c4, %c0_86, %c0_87], %232 {strides = array<i32>} : memref<14x16x128xf32, #tpu.memory_space<vmem>>, vector<1x16x128xf32>,
    %c5 = arith.constant 5 : index
    %c0_88 = arith.constant 0 : index
    %c0_89 = arith.constant 0 : index
    %233 = vector.load %arg11[%c5, %c0_88, %c0_89] : memref<14x16x128xf32, #tpu.memory_space<vmem>>, vector<1x16x128xf32>
    %234 = vector.shape_cast %233 : vector<1x16x128xf32> to vector<16x128xf32>
    %235 = vector.shape_cast %189 : vector<16x128xf32> to vector<1x16x128xf32>
    tpu.vector_store %arg11[%c5, %c0_88, %c0_89], %235 {strides = array<i32>} : memref<14x16x128xf32, #tpu.memory_space<vmem>>, vector<1x16x128xf32>,
    %c6 = arith.constant 6 : index
    %c0_90 = arith.constant 0 : index
    %c0_91 = arith.constant 0 : index
    %236 = vector.load %arg11[%c6, %c0_90, %c0_91] : memref<14x16x128xf32, #tpu.memory_space<vmem>>, vector<1x16x128xf32>
    %237 = vector.shape_cast %236 : vector<1x16x128xf32> to vector<16x128xf32>
    %238 = vector.shape_cast %121 : vector<16x128xf32> to vector<1x16x128xf32>
    tpu.vector_store %arg11[%c6, %c0_90, %c0_91], %238 {strides = array<i32>} : memref<14x16x128xf32, #tpu.memory_space<vmem>>, vector<1x16x128xf32>,
    %c4_92 = arith.constant 4 : index
    %239 = memref.load %arg10[%c4_92] : memref<8xf32, #tpu.memory_space<smem>>
    %c5_93 = arith.constant 5 : index
    %240 = memref.load %arg10[%c5_93] : memref<8xf32, #tpu.memory_space<smem>>
    %c6_94 = arith.constant 6 : index
    %241 = memref.load %arg10[%c6_94] : memref<8xf32, #tpu.memory_space<smem>>
    %c7 = arith.constant 7 : index
    %242 = memref.load %arg10[%c7] : memref<8xf32, #tpu.memory_space<smem>>
    %cst_95 = arith.constant 5.400000e-01 : f32
    %243 = arith.mulf %239, %cst_95 : f32
    %cst_96 = arith.constant 1.000000e+00 : f32
    %244 = arith.divf %cst_96, %243 : f32
    %cst_97 = arith.constant 1.000000e+00 : f32
    %245 = arith.divf %cst_97, %239 : f32
    %cst_98 = arith.constant 1.000000e+00 : f32
    %246 = arith.divf %cst_98, %240 : f32
    %c2_99 = arith.constant 2 : index
    %c0_100 = arith.constant 0 : index
    %c0_101 = arith.constant 0 : index
    %247 = vector.load %arg1[%c2_99, %c0_100, %c0_101] : memref<4x16x128xf32, #tpu.memory_space<vmem>>, vector<1x16x128xf32>
    %248 = vector.shape_cast %247 : vector<1x16x128xf32> to vector<16x128xf32>
    %c3_102 = arith.constant 3 : index
    %c0_103 = arith.constant 0 : index
    %c0_104 = arith.constant 0 : index
    %249 = vector.load %arg1[%c3_102, %c0_103, %c0_104] : memref<4x16x128xf32, #tpu.memory_space<vmem>>, vector<1x16x128xf32>
    %250 = vector.shape_cast %249 : vector<1x16x128xf32> to vector<16x128xf32>
    %c1_105 = arith.constant 1 : index
    %c0_106 = arith.constant 0 : index
    %c0_107 = arith.constant 0 : index
    %251 = vector.load %arg2[%c1_105, %c0_106, %c0_107] : memref<2x16x128xf32, #tpu.memory_space<vmem>>, vector<1x16x128xf32>
    %252 = vector.shape_cast %251 : vector<1x16x128xf32> to vector<16x128xf32>
    %cst_108 = arith.constant 1.000000e+00 : f32
    %253 = vector.broadcast %cst_108 : f32 to vector<16x128xf32>
    %254 = arith.cmpf oeq, %252, %253 : vector<16x128xf32>
    %c1_109 = arith.constant 1 : index
    %c0_110 = arith.constant 0 : index
    %c0_111 = arith.constant 0 : index
    %255 = vector.load %arg3[%c1_109, %c0_110, %c0_111] : memref<2x16x128xf32, #tpu.memory_space<vmem>>, vector<1x16x128xf32>
    %256 = vector.shape_cast %255 : vector<1x16x128xf32> to vector<16x128xf32>
    %c1_112 = arith.constant 1 : index
    %c0_113 = arith.constant 0 : index
    %c0_114 = arith.constant 0 : index
    %257 = vector.load %arg4[%c1_112, %c0_113, %c0_114] : memref<2x16x128xf32, #tpu.memory_space<vmem>>, vector<1x16x128xf32>
    %258 = vector.shape_cast %257 : vector<1x16x128xf32> to vector<16x128xf32>
    %cst_115 = arith.constant 1.000000e+00 : f32
    %259 = vector.broadcast %cst_115 : f32 to vector<16x128xf32>
    %260 = arith.cmpf oeq, %258, %259 : vector<16x128xf32>
    %c1_116 = arith.constant 1 : index
    %c0_117 = arith.constant 0 : index
    %c0_118 = arith.constant 0 : index
    %261 = vector.load %arg5[%c1_116, %c0_117, %c0_118] : memref<2x16x128xf32, #tpu.memory_space<vmem>>, vector<1x16x128xf32>
    %262 = vector.shape_cast %261 : vector<1x16x128xf32> to vector<16x128xf32>
    %c1_119 = arith.constant 1 : index
    %c0_120 = arith.constant 0 : index
    %c0_121 = arith.constant 0 : index
    %263 = vector.load %arg6[%c1_119, %c0_120, %c0_121] : memref<2x16x128xf32, #tpu.memory_space<vmem>>, vector<1x16x128xf32>
    %264 = vector.shape_cast %263 : vector<1x16x128xf32> to vector<16x128xf32>
    %cst_122 = arith.constant 1.000000e+00 : f32
    %265 = vector.broadcast %cst_122 : f32 to vector<16x128xf32>
    %266 = arith.cmpf oeq, %264, %265 : vector<16x128xf32>
    %267 = arith.extui %254 : vector<16x128xi1> to vector<16x128xi32>
    %268 = arith.sitofp %267 : vector<16x128xi32> to vector<16x128xf32>
    %269 = arith.extui %260 : vector<16x128xi1> to vector<16x128xi32>
    %270 = arith.sitofp %269 : vector<16x128xi32> to vector<16x128xf32>
    %271 = arith.extui %266 : vector<16x128xi1> to vector<16x128xi32>
    %272 = arith.sitofp %271 : vector<16x128xi32> to vector<16x128xf32>
    %273 = vector.extract_strided_slice %8 {offsets = [64, 0], sizes = [16, 128], strides = [1, 1]} : vector<128x128xf32> to vector<16x128xf32>
    %cst_123 = arith.constant 1.280000e+02 : f32
    %274 = vector.broadcast %cst_123 : f32 to vector<16x128xf32>
    %275 = arith.mulf %273, %274 : vector<16x128xf32>
    %276 = vector.extract_strided_slice %8 {offsets = [80, 0], sizes = [16, 128], strides = [1, 1]} : vector<128x128xf32> to vector<16x128xf32>
    %277 = vector.extract_strided_slice %8 {offsets = [96, 0], sizes = [16, 128], strides = [1, 1]} : vector<128x128xf32> to vector<16x128xf32>
    %278 = vector.extract_strided_slice %8 {offsets = [112, 0], sizes = [16, 128], strides = [1, 1]} : vector<128x128xf32> to vector<16x128xf32>
    %cst_124 = arith.constant 0.000000e+00 : f32
    %279 = vector.broadcast %cst_124 : f32 to vector<16x128xf32>
    %280 = arith.cmpf ogt, %275, %279 : vector<16x128xf32>
    %cst_125 = arith.constant 0.000000e+00 : f32
    %cst_126 = arith.constant 1.000000e+00 : f32
    %281 = vector.broadcast %cst_125 : f32 to vector<16x128xf32>
    %282 = vector.broadcast %cst_126 : f32 to vector<16x128xf32>
    %283 = arith.select %280, %281, %282 : vector<16x128xi1>, vector<16x128xf32>
    %284 = arith.addf %275, %283 : vector<16x128xf32>
    %285 = tpu.reciprocal %284 {approx = true} : vector<16x128xf32> -> vector<16x128xf32>
    %286 = arith.mulf %284, %285 : vector<16x128xf32>
    %cst_127 = arith.constant 2.000000e+00 : f32
    %287 = vector.broadcast %cst_127 : f32 to vector<16x128xf32>
    %288 = arith.subf %287, %286 : vector<16x128xf32>
    %289 = arith.mulf %285, %288 : vector<16x128xf32>
    %290 = vector.broadcast %243 : f32 to vector<16x128xf32>
    %291 = arith.mulf %290, %289 : vector<16x128xf32>
    %cst_128 = arith.constant 1.000000e-03 : f32
    %cst_129 = arith.constant 8.000000e+01 : f32
    %292 = vector.broadcast %cst_128 : f32 to vector<16x128xf32>
    %293 = arith.maximumf %292, %291 : vector<16x128xf32>
    %294 = vector.broadcast %cst_129 : f32 to vector<16x128xf32>
    %295 = arith.minimumf %294, %293 : vector<16x128xf32>
    %cst_130 = arith.constant 0.000000e+00 : f32
    %296 = vector.broadcast %cst_130 : f32 to vector<16x128xf32>
    %297 = arith.cmpf ogt, %256, %296 : vector<16x128xf32>
    %cst_131 = arith.constant 0.000000e+00 : f32
    %cst_132 = arith.constant 1.000000e+00 : f32
    %298 = vector.broadcast %cst_131 : f32 to vector<16x128xf32>
    %299 = vector.broadcast %cst_132 : f32 to vector<16x128xf32>
    %300 = arith.select %297, %298, %299 : vector<16x128xi1>, vector<16x128xf32>
    %301 = arith.addf %256, %300 : vector<16x128xf32>
    %302 = tpu.reciprocal %301 {approx = true} : vector<16x128xf32> -> vector<16x128xf32>
    %303 = arith.mulf %301, %302 : vector<16x128xf32>
    %cst_133 = arith.constant 2.000000e+00 : f32
    %304 = vector.broadcast %cst_133 : f32 to vector<16x128xf32>
    %305 = arith.subf %304, %303 : vector<16x128xf32>
    %306 = arith.mulf %302, %305 : vector<16x128xf32>
    %307 = vector.broadcast %243 : f32 to vector<16x128xf32>
    %308 = arith.mulf %307, %306 : vector<16x128xf32>
    %309 = vector.broadcast %244 : f32 to vector<16x128xf32>
    %310 = arith.mulf %301, %309 : vector<16x128xf32>
    %311 = arith.subf %256, %275 : vector<16x128xf32>
    %312 = math.absf %311 : vector<16x128xf32>
    %313 = arith.mulf %312, %270 : vector<16x128xf32>
    %cst_134 = arith.constant 3.000000e+00 : f32
    %314 = vector.broadcast %cst_134 : f32 to vector<16x128xf32>
    %315 = arith.cmpf ogt, %313, %314 : vector<16x128xf32>
    %316 = arith.andi %260, %315 : vector<16x128xi1>
    %cst_135 = arith.constant 5.000000e-02 : f32
    %317 = vector.broadcast %cst_135 : f32 to vector<16x128xf32>
    %318 = arith.mulf %317, %256 : vector<16x128xf32>
    %319 = arith.cmpf ogt, %313, %318 : vector<16x128xf32>
    %320 = arith.andi %316, %319 : vector<16x128xi1>
    %321 = arith.subf %308, %295 : vector<16x128xf32>
    %322 = arith.extui %320 : vector<16x128xi1> to vector<16x128xi32>
    %323 = arith.sitofp %322 : vector<16x128xi32> to vector<16x128xf32>
    %cst_136 = arith.constant dense<0.000000e+00> : vector<128xf32>
    %324 = vector.multi_reduction <add>, %323, %cst_136 [0] : vector<16x128xf32> to vector<128xf32>
    %325 = vector.shape_cast %324 : vector<128xf32> to vector<1x128xf32>
    %326 = arith.addf %105, %325 : vector<1x128xf32>
    %cst_137 = arith.constant dense<0.000000e+00> : vector<128xf32>
    %327 = vector.multi_reduction <add>, %270, %cst_137 [0] : vector<16x128xf32> to vector<128xf32>
    %328 = vector.shape_cast %327 : vector<128xf32> to vector<1x128xf32>
    %329 = arith.addf %108, %328 : vector<1x128xf32>
    %330 = math.absf %321 : vector<16x128xf32>
    %331 = arith.mulf %330, %310 : vector<16x128xf32>
    %332 = arith.mulf %331, %270 : vector<16x128xf32>
    %cst_138 = arith.constant dense<0.000000e+00> : vector<128xf32>
    %333 = vector.multi_reduction <add>, %332, %cst_138 [0] : vector<16x128xf32> to vector<128xf32>
    %334 = vector.shape_cast %333 : vector<128xf32> to vector<1x128xf32>
    %335 = arith.addf %114, %334 : vector<1x128xf32>
    %336 = arith.mulf %321, %321 : vector<16x128xf32>
    %337 = arith.mulf %336, %310 : vector<16x128xf32>
    %338 = arith.mulf %337, %270 : vector<16x128xf32>
    %cst_139 = arith.constant dense<0.000000e+00> : vector<128xf32>
    %339 = vector.multi_reduction <add>, %338, %cst_139 [0] : vector<16x128xf32> to vector<128xf32>
    %340 = vector.shape_cast %339 : vector<128xf32> to vector<1x128xf32>
    %341 = arith.addf %120, %340 : vector<1x128xf32>
    %342 = arith.addf %295, %278 : vector<16x128xf32>
    %343 = vector.broadcast %241 : f32 to vector<16x128xf32>
    %344 = arith.subf %1, %343 : vector<16x128xf32>
    %345 = vector.broadcast %245 : f32 to vector<16x128xf32>
    %346 = arith.mulf %344, %345 : vector<16x128xf32>
    %347 = arith.mulf %346, %295 : vector<16x128xf32>
    %348 = arith.addf %347, %276 : vector<16x128xf32>
    %349 = vector.broadcast %242 : f32 to vector<16x128xf32>
    %350 = arith.subf %3, %349 : vector<16x128xf32>
    %351 = vector.broadcast %246 : f32 to vector<16x128xf32>
    %352 = arith.mulf %350, %351 : vector<16x128xf32>
    %353 = arith.mulf %352, %295 : vector<16x128xf32>
    %354 = arith.addf %353, %277 : vector<16x128xf32>
    %355 = vector.broadcast %239 : f32 to vector<16x128xf32>
    %356 = arith.mulf %355, %348 : vector<16x128xf32>
    %357 = vector.broadcast %241 : f32 to vector<16x128xf32>
    %358 = arith.mulf %357, %342 : vector<16x128xf32>
    %359 = arith.addf %356, %358 : vector<16x128xf32>
    %360 = vector.broadcast %240 : f32 to vector<16x128xf32>
    %361 = arith.mulf %360, %354 : vector<16x128xf32>
    %362 = vector.broadcast %242 : f32 to vector<16x128xf32>
    %363 = arith.mulf %362, %342 : vector<16x128xf32>
    %364 = arith.addf %361, %363 : vector<16x128xf32>
    %cst_140 = arith.constant 9.99999993E-9 : f32
    %365 = vector.broadcast %cst_140 : f32 to vector<16x128xf32>
    %366 = arith.addf %342, %365 : vector<16x128xf32>
    %367 = tpu.reciprocal %366 {approx = true} : vector<16x128xf32> -> vector<16x128xf32>
    %368 = arith.mulf %366, %367 : vector<16x128xf32>
    %cst_141 = arith.constant 2.000000e+00 : f32
    %369 = vector.broadcast %cst_141 : f32 to vector<16x128xf32>
    %370 = arith.subf %369, %368 : vector<16x128xf32>
    %371 = arith.mulf %367, %370 : vector<16x128xf32>
    %372 = arith.mulf %359, %371 : vector<16x128xf32>
    %373 = arith.subf %372, %1 : vector<16x128xf32>
    %374 = arith.mulf %364, %371 : vector<16x128xf32>
    %375 = arith.subf %374, %3 : vector<16x128xf32>
    %376 = arith.subf %248, %373 : vector<16x128xf32>
    %377 = arith.subf %250, %375 : vector<16x128xf32>
    %378 = arith.mulf %376, %376 : vector<16x128xf32>
    %379 = arith.mulf %377, %377 : vector<16x128xf32>
    %380 = arith.addf %378, %379 : vector<16x128xf32>
    %381 = math.sqrt %380 : vector<16x128xf32>
    %382 = arith.mulf %381, %268 : vector<16x128xf32>
    %383 = arith.mulf %248, %248 : vector<16x128xf32>
    %384 = arith.mulf %250, %250 : vector<16x128xf32>
    %385 = arith.addf %383, %384 : vector<16x128xf32>
    %386 = math.sqrt %385 : vector<16x128xf32>
    %cst_142 = arith.constant 9.99999993E-9 : f32
    %387 = vector.broadcast %cst_142 : f32 to vector<16x128xf32>
    %388 = arith.addf %386, %387 : vector<16x128xf32>
    %cst_143 = arith.constant 3.000000e+00 : f32
    %389 = vector.broadcast %cst_143 : f32 to vector<16x128xf32>
    %390 = arith.cmpf ogt, %382, %389 : vector<16x128xf32>
    %391 = arith.andi %254, %390 : vector<16x128xi1>
    %cst_144 = arith.constant 5.000000e-02 : f32
    %392 = vector.broadcast %cst_144 : f32 to vector<16x128xf32>
    %393 = arith.mulf %392, %388 : vector<16x128xf32>
    %394 = arith.cmpf ogt, %382, %393 : vector<16x128xf32>
    %395 = arith.andi %391, %394 : vector<16x128xi1>
    %cst_145 = arith.constant dense<0.000000e+00> : vector<128xf32>
    %396 = vector.multi_reduction <add>, %382, %cst_145 [0] : vector<16x128xf32> to vector<128xf32>
    %397 = vector.shape_cast %396 : vector<128xf32> to vector<1x128xf32>
    %398 = arith.addf %177, %397 : vector<1x128xf32>
    %399 = arith.extui %395 : vector<16x128xi1> to vector<16x128xi32>
    %400 = arith.sitofp %399 : vector<16x128xi32> to vector<16x128xf32>
    %cst_146 = arith.constant dense<0.000000e+00> : vector<128xf32>
    %401 = vector.multi_reduction <add>, %400, %cst_146 [0] : vector<16x128xf32> to vector<128xf32>
    %402 = vector.shape_cast %401 : vector<128xf32> to vector<1x128xf32>
    %403 = arith.addf %182, %402 : vector<1x128xf32>
    %404 = tpu.reciprocal %342 {approx = true} : vector<16x128xf32> -> vector<16x128xf32>
    %405 = arith.mulf %342, %404 : vector<16x128xf32>
    %cst_147 = arith.constant 2.000000e+00 : f32
    %406 = vector.broadcast %cst_147 : f32 to vector<16x128xf32>
    %407 = arith.subf %406, %405 : vector<16x128xf32>
    %408 = arith.mulf %404, %407 : vector<16x128xf32>
    %409 = vector.broadcast %243 : f32 to vector<16x128xf32>
    %410 = arith.mulf %409, %408 : vector<16x128xf32>
    %411 = arith.subf %262, %410 : vector<16x128xf32>
    %412 = math.absf %411 : vector<16x128xf32>
    %413 = arith.mulf %412, %272 : vector<16x128xf32>
    %cst_148 = arith.constant 3.000000e+00 : f32
    %414 = vector.broadcast %cst_148 : f32 to vector<16x128xf32>
    %415 = arith.cmpf ogt, %413, %414 : vector<16x128xf32>
    %416 = arith.andi %266, %415 : vector<16x128xi1>
    %cst_149 = arith.constant 5.000000e-02 : f32
    %417 = vector.broadcast %cst_149 : f32 to vector<16x128xf32>
    %418 = arith.mulf %417, %262 : vector<16x128xf32>
    %419 = arith.cmpf ogt, %413, %418 : vector<16x128xf32>
    %420 = arith.andi %416, %419 : vector<16x128xi1>
    %421 = arith.extui %420 : vector<16x128xi1> to vector<16x128xi32>
    %422 = arith.sitofp %421 : vector<16x128xi32> to vector<16x128xf32>
    %cst_150 = arith.constant dense<0.000000e+00> : vector<128xf32>
    %423 = vector.multi_reduction <add>, %422, %cst_150 [0] : vector<16x128xf32> to vector<128xf32>
    %424 = vector.shape_cast %423 : vector<128xf32> to vector<1x128xf32>
    %425 = arith.addf %204, %424 : vector<1x128xf32>
    %426 = arith.mulf %268, %270 : vector<16x128xf32>
    %427 = arith.mulf %426, %272 : vector<16x128xf32>
    %428 = arith.ori %395, %320 : vector<16x128xi1>
    %429 = arith.ori %428, %420 : vector<16x128xi1>
    %430 = arith.extui %429 : vector<16x128xi1> to vector<16x128xi32>
    %431 = arith.sitofp %430 : vector<16x128xi32> to vector<16x128xf32>
    %432 = arith.mulf %431, %427 : vector<16x128xf32>
    %cst_151 = arith.constant dense<0.000000e+00> : vector<128xf32>
    %433 = vector.multi_reduction <add>, %427, %cst_151 [0] : vector<16x128xf32> to vector<128xf32>
    %434 = vector.shape_cast %433 : vector<128xf32> to vector<1x128xf32>
    %435 = arith.addf %214, %434 : vector<1x128xf32>
    %cst_152 = arith.constant dense<0.000000e+00> : vector<128xf32>
    %436 = vector.multi_reduction <add>, %432, %cst_152 [0] : vector<16x128xf32> to vector<128xf32>
    %437 = vector.shape_cast %436 : vector<128xf32> to vector<1x128xf32>
    %438 = arith.addf %217, %437 : vector<1x128xf32>
    %c7_153 = arith.constant 7 : index
    %c0_154 = arith.constant 0 : index
    %c0_155 = arith.constant 0 : index
    %439 = vector.load %arg11[%c7_153, %c0_154, %c0_155] : memref<14x16x128xf32, #tpu.memory_space<vmem>>, vector<1x16x128xf32>
    %440 = vector.shape_cast %439 : vector<1x16x128xf32> to vector<16x128xf32>
    %441 = vector.shape_cast %427 : vector<16x128xf32> to vector<1x16x128xf32>
    tpu.vector_store %arg11[%c7_153, %c0_154, %c0_155], %441 {strides = array<i32>} : memref<14x16x128xf32, #tpu.memory_space<vmem>>, vector<1x16x128xf32>,
    %c8 = arith.constant 8 : index
    %c0_156 = arith.constant 0 : index
    %c0_157 = arith.constant 0 : index
    %442 = vector.load %arg11[%c8, %c0_156, %c0_157] : memref<14x16x128xf32, #tpu.memory_space<vmem>>, vector<1x16x128xf32>
    %443 = vector.shape_cast %442 : vector<1x16x128xf32> to vector<16x128xf32>
    %444 = vector.shape_cast %275 : vector<16x128xf32> to vector<1x16x128xf32>
    tpu.vector_store %arg11[%c8, %c0_156, %c0_157], %444 {strides = array<i32>} : memref<14x16x128xf32, #tpu.memory_space<vmem>>, vector<1x16x128xf32>,
    %c9 = arith.constant 9 : index
    %c0_158 = arith.constant 0 : index
    %c0_159 = arith.constant 0 : index
    %445 = vector.load %arg11[%c9, %c0_158, %c0_159] : memref<14x16x128xf32, #tpu.memory_space<vmem>>, vector<1x16x128xf32>
    %446 = vector.shape_cast %445 : vector<1x16x128xf32> to vector<16x128xf32>
    %447 = vector.shape_cast %295 : vector<16x128xf32> to vector<1x16x128xf32>
    tpu.vector_store %arg11[%c9, %c0_158, %c0_159], %447 {strides = array<i32>} : memref<14x16x128xf32, #tpu.memory_space<vmem>>, vector<1x16x128xf32>,
    %c10 = arith.constant 10 : index
    %c0_160 = arith.constant 0 : index
    %c0_161 = arith.constant 0 : index
    %448 = vector.load %arg11[%c10, %c0_160, %c0_161] : memref<14x16x128xf32, #tpu.memory_space<vmem>>, vector<1x16x128xf32>
    %449 = vector.shape_cast %448 : vector<1x16x128xf32> to vector<16x128xf32>
    %450 = vector.shape_cast %373 : vector<16x128xf32> to vector<1x16x128xf32>
    tpu.vector_store %arg11[%c10, %c0_160, %c0_161], %450 {strides = array<i32>} : memref<14x16x128xf32, #tpu.memory_space<vmem>>, vector<1x16x128xf32>,
    %c11 = arith.constant 11 : index
    %c0_162 = arith.constant 0 : index
    %c0_163 = arith.constant 0 : index
    %451 = vector.load %arg11[%c11, %c0_162, %c0_163] : memref<14x16x128xf32, #tpu.memory_space<vmem>>, vector<1x16x128xf32>
    %452 = vector.shape_cast %451 : vector<1x16x128xf32> to vector<16x128xf32>
    %453 = vector.shape_cast %375 : vector<16x128xf32> to vector<1x16x128xf32>
    tpu.vector_store %arg11[%c11, %c0_162, %c0_163], %453 {strides = array<i32>} : memref<14x16x128xf32, #tpu.memory_space<vmem>>, vector<1x16x128xf32>,
    %c12 = arith.constant 12 : index
    %c0_164 = arith.constant 0 : index
    %c0_165 = arith.constant 0 : index
    %454 = vector.load %arg11[%c12, %c0_164, %c0_165] : memref<14x16x128xf32, #tpu.memory_space<vmem>>, vector<1x16x128xf32>
    %455 = vector.shape_cast %454 : vector<1x16x128xf32> to vector<16x128xf32>
    %456 = vector.shape_cast %410 : vector<16x128xf32> to vector<1x16x128xf32>
    tpu.vector_store %arg11[%c12, %c0_164, %c0_165], %456 {strides = array<i32>} : memref<14x16x128xf32, #tpu.memory_space<vmem>>, vector<1x16x128xf32>,
    %c13 = arith.constant 13 : index
    %c0_166 = arith.constant 0 : index
    %c0_167 = arith.constant 0 : index
    %457 = vector.load %arg11[%c13, %c0_166, %c0_167] : memref<14x16x128xf32, #tpu.memory_space<vmem>>, vector<1x16x128xf32>
    %458 = vector.shape_cast %457 : vector<1x16x128xf32> to vector<16x128xf32>
    %459 = vector.shape_cast %342 : vector<16x128xf32> to vector<1x16x128xf32>
    tpu.vector_store %arg11[%c13, %c0_166, %c0_167], %459 {strides = array<i32>} : memref<14x16x128xf32, #tpu.memory_space<vmem>>, vector<1x16x128xf32>,
    %cst_168 = arith.constant 0.000000e+00 : f32
    %460 = vector.broadcast %cst_168 : f32 to vector<7x128xf32>
    %461 = tpu.concatenate %435, %326, %329, %335, %341, %398, %403, %425, %438, %460 in 0 : vector<1x128xf32>, vector<1x128xf32>, vector<1x128xf32>, vector<1x128xf32>, vector<1x128xf32>, vector<1x128xf32>, vector<1x128xf32>, vector<1x128xf32>, vector<1x128xf32>, vector<7x128xf32> -> vector<16x128xf32>
    %c0_169 = arith.constant 0 : index
    %c0_170 = arith.constant 0 : index
    %462 = vector.load %arg12[%c0_169, %c0_170] : memref<16x128xf32, #tpu.memory_space<vmem>>, vector<16x128xf32>
    tpu.vector_store %arg12[%c0_169, %c0_170], %461 {strides = array<i32>} : memref<16x128xf32, #tpu.memory_space<vmem>>, vector<16x128xf32>,
    return
  }
  func.func @transform_0(%arg0: i32) -> (i32, i32, i32) {
    %c0_i32 = arith.constant 0 : i32
    %c0_i32_0 = arith.constant 0 : i32
    %c0_i32_1 = arith.constant 0 : i32
    %c0_i32_2 = arith.constant 0 : i32
    return %c0_i32, %c0_i32_0, %c0_i32_1 : i32, i32, i32
  }
  func.func @transform_1(%arg0: i32) -> (i32, i32, i32) {
    %c0_i32 = arith.constant 0 : i32
    %c0_i32_0 = arith.constant 0 : i32
    %c0_i32_1 = arith.constant 0 : i32
    %c0_i32_2 = arith.constant 0 : i32
    return %c0_i32, %c0_i32_0, %c0_i32_1 : i32, i32, i32
  }
  func.func @transform_2(%arg0: i32) -> (i32, i32, i32) {
    %c0_i32 = arith.constant 0 : i32
    %c0_i32_0 = arith.constant 0 : i32
    %c0_i32_1 = arith.constant 0 : i32
    %c0_i32_2 = arith.constant 0 : i32
    return %c0_i32, %c0_i32_0, %c0_i32_1 : i32, i32, i32
  }
  func.func @transform_3(%arg0: i32) -> (i32, i32, i32) {
    %c0_i32 = arith.constant 0 : i32
    %c0_i32_0 = arith.constant 0 : i32
    %c0_i32_1 = arith.constant 0 : i32
    %c0_i32_2 = arith.constant 0 : i32
    return %c0_i32, %c0_i32_0, %c0_i32_1 : i32, i32, i32
  }
  func.func @transform_4(%arg0: i32) -> (i32, i32, i32) {
    %c0_i32 = arith.constant 0 : i32
    %c0_i32_0 = arith.constant 0 : i32
    %c0_i32_1 = arith.constant 0 : i32
    %c0_i32_2 = arith.constant 0 : i32
    return %c0_i32, %c0_i32_0, %c0_i32_1 : i32, i32, i32
  }
  func.func @transform_5(%arg0: i32) -> (i32, i32, i32) {
    %c0_i32 = arith.constant 0 : i32
    %c0_i32_0 = arith.constant 0 : i32
    %c0_i32_1 = arith.constant 0 : i32
    %c0_i32_2 = arith.constant 0 : i32
    return %c0_i32, %c0_i32_0, %c0_i32_1 : i32, i32, i32
  }
  func.func @transform_6(%arg0: i32) -> (i32, i32) {
    %c0_i32 = arith.constant 0 : i32
    %c0_i32_0 = arith.constant 0 : i32
    %c0_i32_1 = arith.constant 0 : i32
    return %c0_i32, %c0_i32_0 : i32, i32
  }
  func.func @transform_7(%arg0: i32) -> (i32, i32) {
    %c0_i32 = arith.constant 0 : i32
    %c0_i32_0 = arith.constant 0 : i32
    %c0_i32_1 = arith.constant 0 : i32
    return %c0_i32, %c0_i32_0 : i32, i32
  }
  func.func @transform_8(%arg0: i32) -> (i32, i32) {
    %c0_i32 = arith.constant 0 : i32
    %c0_i32_0 = arith.constant 0 : i32
    %c0_i32_1 = arith.constant 0 : i32
    return %c0_i32, %c0_i32_0 : i32, i32
  }
  func.func @transform_9(%arg0: i32) -> i32 {
    %c0_i32 = arith.constant 0 : i32
    %c0_i32_0 = arith.constant 0 : i32
    return %c0_i32 : i32
  }
  func.func @transform_10(%arg0: i32) -> (i32, i32, i32) {
    %c0_i32 = arith.constant 0 : i32
    %c0_i32_0 = arith.constant 0 : i32
    %c0_i32_1 = arith.constant 0 : i32
    %c0_i32_2 = arith.constant 0 : i32
    return %c0_i32, %c0_i32_0, %c0_i32_1 : i32, i32, i32
  }
  func.func @transform_11(%arg0: i32) -> (i32, i32) {
    %c0_i32 = arith.constant 0 : i32
    %c0_i32_0 = arith.constant 0 : i32
    %c0_i32_1 = arith.constant 0 : i32
    return %c0_i32, %c0_i32_0 : i32, i32
  }
}

</mosaic_0001>

<llo_original>
// kernel: _run_kernel.1
$region0: #{_run_kernel.1}
  #allocation0 [shape = 'u32[]', space=smem, size = 0x4, offset = 0x4, fixed_abs, tag = 'smem constant byte address 0x4 - core index']
  #allocation1 [shape = 'u32[144,128]{1,0:T(1,128)}', space=vmem, size = 0x12000, scoped, tag = 'internal scratch']
  %s0 = inlined_call_operand.vmem [shape: f32[4,16,128], index: 0, kind: input, shape index: {}]
  %s1 = inlined_call_operand.vmem [shape: f32[2,16,128], index: 1, kind: input, shape index: {}]
  %s2 = inlined_call_operand.hbm [shape: f32[2,16,128], index: 2, kind: input, shape index: {}]
  %s3 = inlined_call_operand.hbm [shape: f32[2,16,128], index: 3, kind: input, shape index: {}]
  %s4 = inlined_call_operand.hbm [shape: f32[2,16,128], index: 4, kind: input, shape index: {}]
  %s5 = inlined_call_operand.hbm [shape: f32[2,16,128], index: 5, kind: input, shape index: {}]
  %s6 = inlined_call_operand.vmem [shape: f32[64,64], index: 6, kind: input, shape index: {}]
  %s7 = inlined_call_operand.vmem [shape: f32[128,64], index: 7, kind: input, shape index: {}]
  %s8 = inlined_call_operand.hbm [shape: f32[64,128], index: 8, kind: input, shape index: {}]
  %s9 = inlined_call_operand.vmem [shape: f32[8], index: 9, kind: input, shape index: {}]
  %s10 = inlined_call_operand.vmem [shape: f32[14,16,128], index: 10, kind: output, shape index: {0}]
  %s11 = inlined_call_operand.vmem [shape: f32[16,128], index: 11, kind: output, shape index: {1}]
  %12 = xla_tuple %s10, %s11
  %s13 = sld [smem:[#allocation0]]
  $region82: #{_run_kernel.1} parent=0
    _
  %s15 = ssub.s32 1, %s13
  %s16 = scalar_select 0, %s15, %s13
  $region1: #{_run_kernel.1} parent=0
    #allocation2 [shape = 'u8[16384]{0}', space=vmem, size = 0x4000, scoped, tag = 'input window, operand 2, single buffered']
    #allocation3 [shape = 's32[1]{0}', space=sflag, size = 0x4, scoped, tag = 'scoped memory for _run_kernel.1']
    #allocation4 [shape = 's32[1]{0}', space=sflag, size = 0x4, scoped, tag = 'scoped memory for _run_kernel.1']
    #allocation5 [shape = 'u8[16384]{0}', space=vmem, size = 0x4000, scoped, tag = 'input window, operand 3, single buffered']
    #allocation6 [shape = 's32[1]{0}', space=sflag, size = 0x4, scoped, tag = 'scoped memory for _run_kernel.1']
    #allocation7 [shape = 'u8[16384]{0}', space=vmem, size = 0x4000, scoped, tag = 'input window, operand 4, single buffered']
    #allocation8 [shape = 'u8[16384]{0}', space=vmem, size = 0x4000, scoped, tag = 'input window, operand 5, single buffered']
    #allocation9 [shape = 's32[1]{0}', space=sflag, size = 0x4, scoped, tag = 'scoped memory for _run_kernel.1']
    #allocation10 [shape = 'u8[32768]{0}', space=vmem, size = 0x8000, scoped, tag = 'input window, operand 8, single buffered']
    #allocation11 [shape = 'u8[512]{0}', space=smem, size = 0x200, scoped, tag = 'input window, operand 9, single buffered']
    %17 = vsyncpa [#allocation3], 0
    %18 = vsyncpa [#allocation6], 0
    %19 = vsyncpa [#allocation9], 0
    %20 = vsyncpa [#allocation4], 0
    // Predicated region
    $region2: #{_run_kernel.1} parent=1 // pred_check
      _
    $region3: #{_run_kernel.1} parent=1 // pred_check_branch
      %22 = sbr.rel (0) target = $region5
    $region4: #{_run_kernel.1} parent=1 // pred_region
      _
    $region5: #{_run_kernel.1} parent=1 // pred_fallthru
      _
    // Predicated region
    $region6: #{_run_kernel.1} parent=1 // pred_check
      _
    $region7: #{_run_kernel.1} parent=1 // pred_check_branch
      %24 = sbr.rel (0) target = $region9
    $region8: #{_run_kernel.1} parent=1 // pred_region
      _
    $region9: #{_run_kernel.1} parent=1 // pred_fallthru
      _
    // Predicated region
    $region10: #{_run_kernel.1} parent=1 // pred_check
      _
    $region11: #{_run_kernel.1} parent=1 // pred_check_branch
      %26 = sbr.rel (0) target = $region13
    $region12: #{_run_kernel.1} parent=1 // pred_region
      %s28 = ssub.s32 512, 512
      %29 = vsyncadd [#allocation3], %s28
      %s30 = sshll.u32 [#allocation2], 4
      %s31 = int_to_ptr.vmem [resolvable:$true] %s30
      %36 = dma.hbm_to_vmem [thread:$0]  %s2, 512, %s31, [#allocation3], 128, 128, 8
    $region13: #{_run_kernel.1} parent=1 // pred_fallthru
      _
    // Predicated region
    $region14: #{_run_kernel.1} parent=1 // pred_check
      _
    $region15: #{_run_kernel.1} parent=1 // pred_check_branch
      %38 = sbr.rel (0) target = $region17
    $region16: #{_run_kernel.1} parent=1 // pred_region
      %s40 = ssub.s32 512, 512
      %41 = vsyncadd [#allocation6], %s40
      %s42 = sshll.u32 [#allocation5], 4
      %s43 = int_to_ptr.vmem [resolvable:$true] %s42
      %48 = dma.hbm_to_vmem [thread:$0]  %s3, 512, %s43, [#allocation6], 128, 128, 8
    $region17: #{_run_kernel.1} parent=1 // pred_fallthru
      _
    // Predicated region
    $region18: #{_run_kernel.1} parent=1 // pred_check
      _
    $region19: #{_run_kernel.1} parent=1 // pred_check_branch
      %50 = sbr.rel (0) target = $region21
    $region20: #{_run_kernel.1} parent=1 // pred_region
      %s52 = ssub.s32 512, 512
      %53 = vsyncadd [#allocation6], %s52
      %s54 = sshll.u32 [#allocation7], 4
      %s55 = int_to_ptr.vmem [resolvable:$true] %s54
      %60 = dma.hbm_to_vmem [thread:$0]  %s4, 512, %s55, [#allocation6], 128, 128, 8
    $region21: #{_run_kernel.1} parent=1 // pred_fallthru
      _
    // Predicated region
    $region22: #{_run_kernel.1} parent=1 // pred_check
      _
    $region23: #{_run_kernel.1} parent=1 // pred_check_branch
      %62 = sbr.rel (0) target = $region25
    $region24: #{_run_kernel.1} parent=1 // pred_region
      %s64 = ssub.s32 512, 512
      %65 = vsyncadd [#allocation9], %s64
      %s66 = sshll.u32 [#allocation8], 4
      %s67 = int_to_ptr.vmem [resolvable:$true] %s66
      %72 = dma.hbm_to_vmem [thread:$0]  %s5, 512, %s67, [#allocation9], 128, 128, 8
    $region25: #{_run_kernel.1} parent=1 // pred_fallthru
      _
    // Predicated region
    $region26: #{_run_kernel.1} parent=1 // pred_check
      _
    $region27: #{_run_kernel.1} parent=1 // pred_check_branch
      %74 = sbr.rel (0) target = $region29
    $region28: #{_run_kernel.1} parent=1 // pred_region
      _
    $region29: #{_run_kernel.1} parent=1 // pred_fallthru
      _
    // Predicated region
    $region30: #{_run_kernel.1} parent=1 // pred_check
      _
    $region31: #{_run_kernel.1} parent=1 // pred_check_branch
      %76 = sbr.rel (0) target = $region33
    $region32: #{_run_kernel.1} parent=1 // pred_region
      _
    $region33: #{_run_kernel.1} parent=1 // pred_fallthru
      _
    // Predicated region
    $region34: #{_run_kernel.1} parent=1 // pred_check
      _
    $region35: #{_run_kernel.1} parent=1 // pred_check_branch
      %78 = sbr.rel (0) target = $region37
    $region36: #{_run_kernel.1} parent=1 // pred_region
      %s80 = ssub.s32 1024, 1024
      %81 = vsyncadd [#allocation9], %s80
      %s82 = sshll.u32 [#allocation10], 4
      %s83 = int_to_ptr.vmem [resolvable:$true] %s82
      %88 = dma.hbm_to_vmem [thread:$0]  %s8, 1024, %s83, [#allocation9], 128, 128, 8
    $region37: #{_run_kernel.1} parent=1 // pred_fallthru
      _
    // Predicated region
    $region38: #{_run_kernel.1} parent=1 // pred_check
      _
    $region39: #{_run_kernel.1} parent=1 // pred_check_branch
      %90 = sbr.rel (0) target = $region41
    $region40: #{_run_kernel.1} parent=1 // pred_region
      %s92 = ssub.s32 16, 16
      %93 = vsyncadd [#allocation4], %s92
      %s95 = sshll.u32 %s9, 4
      %s96 = int_to_ptr.vmem [resolvable:$true] %s95
      %98 = dma.vmem_to_smem %s96, 16, [#allocation11], [#allocation4]
    $region41: #{_run_kernel.1} parent=1 // pred_fallthru
      _
    // Predicated region
    $region42: #{_run_kernel.1} parent=1 // pred_check
      _
    $region43: #{_run_kernel.1} parent=1 // pred_check_branch
      %100 = sbr.rel (0) target = $region45
    $region44: #{_run_kernel.1} parent=1 // pred_region
      %101 = dma.done [#allocation3], 512
    $region45: #{_run_kernel.1} parent=1 // pred_fallthru
      _
    // Predicated region
    $region46: #{_run_kernel.1} parent=1 // pred_check
      _
    $region47: #{_run_kernel.1} parent=1 // pred_check_branch
      %103 = sbr.rel (0) target = $region49
    $region48: #{_run_kernel.1} parent=1 // pred_region
      %104 = dma.done [#allocation6], 512
    $region49: #{_run_kernel.1} parent=1 // pred_fallthru
      _
    // Predicated region
    $region50: #{_run_kernel.1} parent=1 // pred_check
      _
    $region51: #{_run_kernel.1} parent=1 // pred_check_branch
      %106 = sbr.rel (0) target = $region53
    $region52: #{_run_kernel.1} parent=1 // pred_region
      %107 = dma.done [#allocation6], 512
    $region53: #{_run_kernel.1} parent=1 // pred_fallthru
      _
    // Predicated region
    $region54: #{_run_kernel.1} parent=1 // pred_check
      _
    $region55: #{_run_kernel.1} parent=1 // pred_check_branch
      %109 = sbr.rel (0) target = $region57
    $region56: #{_run_kernel.1} parent=1 // pred_region
      %110 = dma.done [#allocation9], 512
    $region57: #{_run_kernel.1} parent=1 // pred_fallthru
      _
    // Predicated region
    $region58: #{_run_kernel.1} parent=1 // pred_check
      _
    $region59: #{_run_kernel.1} parent=1 // pred_check_branch
      %112 = sbr.rel (0) target = $region61
    $region60: #{_run_kernel.1} parent=1 // pred_region
      %113 = dma.done [#allocation9], 1024
    $region61: #{_run_kernel.1} parent=1 // pred_fallthru
      _
    // Predicated region
    $region62: #{_run_kernel.1} parent=1 // pred_check
      _
    $region63: #{_run_kernel.1} parent=1 // pred_check_branch
      %115 = sbr.rel (0) target = $region65
    $region64: #{_run_kernel.1} parent=1 // pred_region
      %116 = dma.done [#allocation4], 16
    $region65: #{_run_kernel.1} parent=1 // pred_fallthru
      _
    %117 = sfence
    %v118 = vlaneseq
    %v119 = vand.u32 %v118, 127
    %v120 = vcvt.s32.f32 %v119
    %v121 = vlaneseq
    %v122 = vshrl.u32 %v121, 7
    %v123 = vadd.s32 %v122, 8
    %v124 = vcvt.s32.f32 %v122
    %v125 = vcvt.s32.f32 %v123
    %v126 = vld [vmem:[%s6] sm:$0xff]
    %v127 = vld [vmem:[%s6 + $0x8] sm:$0xff]
    %v128 = vld [vmem:[%s6 + $0x10] sm:$0xff]
    %v129 = vld [vmem:[%s6 + $0x18] sm:$0xff]
    %v130 = vld [vmem:[%s6 + $0x20] sm:$0xff]
    %v131 = vld [vmem:[%s6 + $0x28] sm:$0xff]
    %v132 = vld [vmem:[%s6 + $0x30] sm:$0xff]
    %v133 = vld [vmem:[%s6 + $0x38] sm:$0xff]
    %v134 = vld [vmem:[#allocation10] sm:$0xff]
    %v135 = vld [vmem:[#allocation10 + $0x8] sm:$0xff]
    %v136 = vld [vmem:[#allocation10 + $0x10] sm:$0xff]
    %v137 = vld [vmem:[#allocation10 + $0x18] sm:$0xff]
    %v138 = vld [vmem:[#allocation10 + $0x20] sm:$0xff]
    %v139 = vld [vmem:[#allocation10 + $0x28] sm:$0xff]
    %v140 = vld [vmem:[#allocation10 + $0x30] sm:$0xff]
    %v141 = vld [vmem:[#allocation10 + $0x38] sm:$0xff]
    %vm142 = vcmask 523264
    %v144 = vsel %vm142, %v126, 0
    %v147 = vsel %vm142, %v127, 0
    %v150 = vsel %vm142, %v128, 0
    %v153 = vsel %vm142, %v129, 0
    %v156 = vsel %vm142, %v130, 0
    %v159 = vsel %vm142, %v131, 0
    %v162 = vsel %vm142, %v132, 0
    %v165 = vsel %vm142, %v133, 0
    %167 = vmatprep.subr.mxu0 0.0
    %168 = vmatpush1.msra.mxu0 %v134
    %169 = vmatprep.subr.mxu0 0.0
    %170 = vmatpush1.msra.mxu0 %v135
    %171 = vmatprep.subr.mxu0 0.0
    %172 = vmatpush1.msra.mxu0 %v136
    %173 = vmatprep.subr.mxu0 0.0
    %174 = vmatpush1.msra.mxu0 %v137
    %175 = vmatprep.subr.mxu0 0.0
    %176 = vmatpush1.msra.mxu0 %v138
    %177 = vmatprep.subr.mxu0 0.0
    %178 = vmatpush1.msra.mxu0 %v139
    %179 = vmatprep.subr.mxu0 0.0
    %180 = vmatpush1.msra.mxu0 %v140
    %181 = vmatprep.subr.mxu0 0.0
    %182 = vmatpush1.msra.mxu0 %v141
    %183 = vmatprep.subr.mxu0 0.0
    %184 = vmatpush1.msra.mxu0 0.0
    %185 = vmatprep.subr.mxu0 0.0
    %186 = vmatpush1.msra.mxu0 0.0
    %187 = vmatprep.subr.mxu0 0.0
    %188 = vmatpush1.msra.mxu0 0.0
    %189 = vmatprep.subr.mxu0 0.0
    %190 = vmatpush1.msra.mxu0 0.0
    %191 = vmatprep.subr.mxu0 0.0
    %192 = vmatpush1.msra.mxu0 0.0
    %193 = vmatprep.subr.mxu0 0.0
    %194 = vmatpush1.msra.mxu0 0.0
    %195 = vmatprep.subr.mxu0 0.0
    %196 = vmatpush1.msra.mxu0 0.0
    %197 = vmatprep.subr.mxu0 0.0
    %198 = vmatpush1.msra.mxu0 0.0
    %199 = vmatprep.subr.mxu0 0.0
    %200 = vmatpush1.msra.mxu0 0.0
    %201 = vmatprep.subr.mxu0 0.0
    %202 = vmatpush1.msra.mxu0 0.0
    %203 = vmatprep.subr.mxu0 0.0
    %204 = vmatpush1.msra.mxu0 0.0
    %205 = vmatprep.subr.mxu0 0.0
    %206 = vmatpush1.msra.mxu0 0.0
    %207 = vmatprep.subr.mxu0 0.0
    %208 = vmatpush1.msra.mxu0 0.0
    %209 = vmatprep.subr.mxu0 0.0
    %210 = vmatpush1.msra.mxu0 0.0
    %211 = vmatprep.subr.mxu0 0.0
    %212 = vmatpush1.msra.mxu0 0.0
    %213 = vmatprep.subr.mxu0 0.0
    %214 = vmatpush1.msra.mxu0 0.0
    %215 = vmatprep.subr.mxu0 0.0
    %216 = vmatpush1.msra.mxu0 0.0
    %217 = vmatprep.subr.mxu0 0.0
    %218 = vmatpush1.msra.mxu0 0.0
    %219 = vmatprep.subr.mxu0 0.0
    %220 = vmatpush1.msra.mxu0 0.0
    %221 = vmatprep.subr.mxu0 0.0
    %222 = vmatpush1.msra.mxu0 0.0
    %223 = vmatprep.subr.mxu0 0.0
    %224 = vmatpush1.msra.mxu0 0.0
    %225 = vmatprep.subr.mxu0 0.0
    %226 = vmatpush1.msra.mxu0 0.0
    %227 = vmatprep.subr.mxu0 0.0
    %228 = vmatpush1.msra.mxu0 0.0
    %229 = vmatprep.subr.mxu0 0.0
    %230 = vmatpush1.msra.mxu0 0.0
    %231 = vmatprep.mubr.f32.mxu0 0.0
    %232 = vmatmul.mubr.f32.gmra.mrb[0].mxu0 %v144
    %v233 = vpop.f32.mrb[0].mxu0
    %v234 = vadd.f32 0.0, %v233
    %v235 = vpop.f32.mrb[0].mxu0
    %236 = vmatprep.mubr.f32.mxu0 0.0
    %237 = vmatmul.mubr.f32.gmra.mrb[0].mxu0 %v147
    %v238 = vpop.f32.mrb[0].mxu0
    %v239 = vadd.f32 0.0, %v238
    %v240 = vpop.f32.mrb[0].mxu0
    %241 = vmatprep.mubr.f32.mxu0 0.0
    %242 = vmatmul.mubr.f32.gmra.mrb[0].mxu0 %v150
    %v243 = vpop.f32.mrb[0].mxu0
    %v244 = vadd.f32 0.0, %v243
    %v245 = vpop.f32.mrb[0].mxu0
    %246 = vmatprep.mubr.f32.mxu0 0.0
    %247 = vmatmul.mubr.f32.gmra.mrb[0].mxu0 %v153
    %v248 = vpop.f32.mrb[0].mxu0
    %v249 = vadd.f32 0.0, %v248
    %v250 = vpop.f32.mrb[0].mxu0
    %251 = vmatprep.mubr.f32.mxu0 0.0
    %252 = vmatmul.mubr.f32.gmra.mrb[0].mxu0 %v156
    %v253 = vpop.f32.mrb[0].mxu0
    %v254 = vadd.f32 0.0, %v253
    %v255 = vpop.f32.mrb[0].mxu0
    %256 = vmatprep.mubr.f32.mxu0 0.0
    %257 = vmatmul.mubr.f32.gmra.mrb[0].mxu0 %v159
    %v258 = vpop.f32.mrb[0].mxu0
    %v259 = vadd.f32 0.0, %v258
    %v260 = vpop.f32.mrb[0].mxu0
    %261 = vmatprep.mubr.f32.mxu0 0.0
    %262 = vmatmul.mubr.f32.gmra.mrb[0].mxu0 %v162
    %v263 = vpop.f32.mrb[0].mxu0
    %v264 = vadd.f32 0.0, %v263
    %v265 = vpop.f32.mrb[0].mxu0
    %266 = vmatprep.mubr.f32.mxu0 0.0
    %267 = vmatmul.mubr.f32.gmra.mrb[0].mxu0 %v165
    %v268 = vpop.f32.mrb[0].mxu0
    %v269 = vadd.f32 0.0, %v268
    %v270 = vpop.f32.mrb[0].mxu0
    %271 = vdwg.mxu0
    %v272 = vld [vmem:[%s7] sm:$0xff]
    %v273 = vld [vmem:[%s7 + $0x8] sm:$0xff]
    %v274 = vld [vmem:[%s7 + $0x10] sm:$0xff]
    %v275 = vld [vmem:[%s7 + $0x18] sm:$0xff]
    %v276 = vld [vmem:[%s7 + $0x20] sm:$0xff]
    %v277 = vld [vmem:[%s7 + $0x28] sm:$0xff]
    %v278 = vld [vmem:[%s7 + $0x30] sm:$0xff]
    %v279 = vld [vmem:[%s7 + $0x38] sm:$0xff]
    %v280 = vld [vmem:[%s7 + $0x40] sm:$0xff]
    %v281 = vld [vmem:[%s7 + $0x48] sm:$0xff]
    %v282 = vld [vmem:[%s7 + $0x50] sm:$0xff]
    %v283 = vld [vmem:[%s7 + $0x58] sm:$0xff]
    %v284 = vld [vmem:[%s7 + $0x60] sm:$0xff]
    %v285 = vld [vmem:[%s7 + $0x68] sm:$0xff]
    %v286 = vld [vmem:[%s7 + $0x70] sm:$0xff]
    %v287 = vld [vmem:[%s7 + $0x78] sm:$0xff]
    %v289 = vsel %vm142, %v272, 0
    %v292 = vsel %vm142, %v273, 0
    %v295 = vsel %vm142, %v274, 0
    %v298 = vsel %vm142, %v275, 0
    %v301 = vsel %vm142, %v276, 0
    %v304 = vsel %vm142, %v277, 0
    %v307 = vsel %vm142, %v278, 0
    %v310 = vsel %vm142, %v279, 0
    %v313 = vsel %vm142, %v280, 0
    %v316 = vsel %vm142, %v281, 0
    %v319 = vsel %vm142, %v282, 0
    %v322 = vsel %vm142, %v283, 0
    %v325 = vsel %vm142, %v284, 0
    %v328 = vsel %vm142, %v285, 0
    %v331 = vsel %vm142, %v286, 0
    %v334 = vsel %vm142, %v287, 0
    %336 = vmatprep.subr.mxu0 0.0
    %337 = vmatpush1.msra.mxu0 %v234
    %338 = vmatprep.subr.mxu0 0.0
    %339 = vmatpush1.msra.mxu0 %v239
    %340 = vmatprep.subr.mxu0 0.0
    %341 = vmatpush1.msra.mxu0 %v244
    %342 = vmatprep.subr.mxu0 0.0
    %343 = vmatpush1.msra.mxu0 %v249
    %344 = vmatprep.subr.mxu0 0.0
    %345 = vmatpush1.msra.mxu0 %v254
    %346 = vmatprep.subr.mxu0 0.0
    %347 = vmatpush1.msra.mxu0 %v259
    %348 = vmatprep.subr.mxu0 0.0
    %349 = vmatpush1.msra.mxu0 %v264
    %350 = vmatprep.subr.mxu0 0.0
    %351 = vmatpush1.msra.mxu0 %v269
    %352 = vmatprep.subr.mxu0 0.0
    %353 = vmatpush1.msra.mxu0 0.0
    %354 = vmatprep.subr.mxu0 0.0
    %355 = vmatpush1.msra.mxu0 0.0
    %356 = vmatprep.subr.mxu0 0.0
    %357 = vmatpush1.msra.mxu0 0.0
    %358 = vmatprep.subr.mxu0 0.0
    %359 = vmatpush1.msra.mxu0 0.0
    %360 = vmatprep.subr.mxu0 0.0
    %361 = vmatpush1.msra.mxu0 0.0
    %362 = vmatprep.subr.mxu0 0.0
    %363 = vmatpush1.msra.mxu0 0.0
    %364 = vmatprep.subr.mxu0 0.0
    %365 = vmatpush1.msra.mxu0 0.0
    %366 = vmatprep.subr.mxu0 0.0
    %367 = vmatpush1.msra.mxu0 0.0
    %368 = vmatprep.subr.mxu0 0.0
    %369 = vmatpush1.msra.mxu0 0.0
    %370 = vmatprep.subr.mxu0 0.0
    %371 = vmatpush1.msra.mxu0 0.0
    %372 = vmatprep.subr.mxu0 0.0
    %373 = vmatpush1.msra.mxu0 0.0
    %374 = vmatprep.subr.mxu0 0.0
    %375 = vmatpush1.msra.mxu0 0.0
    %376 = vmatprep.subr.mxu0 0.0
    %377 = vmatpush1.msra.mxu0 0.0
    %378 = vmatprep.subr.mxu0 0.0
    %379 = vmatpush1.msra.mxu0 0.0
    %380 = vmatprep.subr.mxu0 0.0
    %381 = vmatpush1.msra.mxu0 0.0
    %382 = vmatprep.subr.mxu0 0.0
    %383 = vmatpush1.msra.mxu0 0.0
    %384 = vmatprep.subr.mxu0 0.0
    %385 = vmatpush1.msra.mxu0 0.0
    %386 = vmatprep.subr.mxu0 0.0
    %387 = vmatpush1.msra.mxu0 0.0
    %388 = vmatprep.subr.mxu0 0.0
    %389 = vmatpush1.msra.mxu0 0.0
    %390 = vmatprep.subr.mxu0 0.0
    %391 = vmatpush1.msra.mxu0 0.0
    %392 = vmatprep.subr.mxu0 0.0
    %393 = vmatpush1.msra.mxu0 0.0
    %394 = vmatprep.subr.mxu0 0.0
    %395 = vmatpush1.msra.mxu0 0.0
    %396 = vmatprep.subr.mxu0 0.0
    %397 = vmatpush1.msra.mxu0 0.0
    %398 = vmatprep.subr.mxu0 0.0
    %399 = vmatpush1.msra.mxu0 0.0
    %400 = vmatprep.mubr.f32.mxu0 0.0
    %401 = vmatmul.mubr.f32.gmra.mrb[0].mxu0 %v289
    %v402 = vpop.f32.mrb[0].mxu0
    %v403 = vadd.f32 0.0, %v402
    %v404 = vpop.f32.mrb[0].mxu0
    %405 = vmatprep.mubr.f32.mxu0 0.0
    %406 = vmatmul.mubr.f32.gmra.mrb[0].mxu0 %v292
    %v407 = vpop.f32.mrb[0].mxu0
    %v408 = vadd.f32 0.0, %v407
    %v409 = vpop.f32.mrb[0].mxu0
    %410 = vmatprep.mubr.f32.mxu0 0.0
    %411 = vmatmul.mubr.f32.gmra.mrb[0].mxu0 %v295
    %v412 = vpop.f32.mrb[0].mxu0
    %v413 = vadd.f32 0.0, %v412
    %v414 = vpop.f32.mrb[0].mxu0
    %415 = vmatprep.mubr.f32.mxu0 0.0
    %416 = vmatmul.mubr.f32.gmra.mrb[0].mxu0 %v298
    %v417 = vpop.f32.mrb[0].mxu0
    %v418 = vadd.f32 0.0, %v417
    %v419 = vpop.f32.mrb[0].mxu0
    %420 = vmatprep.mubr.f32.mxu0 0.0
    %421 = vmatmul.mubr.f32.gmra.mrb[0].mxu0 %v301
    %v422 = vpop.f32.mrb[0].mxu0
    %v423 = vadd.f32 0.0, %v422
    %v424 = vpop.f32.mrb[0].mxu0
    %425 = vmatprep.mubr.f32.mxu0 0.0
    %426 = vmatmul.mubr.f32.gmra.mrb[0].mxu0 %v304
    %v427 = vpop.f32.mrb[0].mxu0
    %v428 = vadd.f32 0.0, %v427
    %v429 = vpop.f32.mrb[0].mxu0
    %430 = vmatprep.mubr.f32.mxu0 0.0
    %431 = vmatmul.mubr.f32.gmra.mrb[0].mxu0 %v307
    %v432 = vpop.f32.mrb[0].mxu0
    %v433 = vadd.f32 0.0, %v432
    %v434 = vpop.f32.mrb[0].mxu0
    %435 = vmatprep.mubr.f32.mxu0 0.0
    %436 = vmatmul.mubr.f32.gmra.mrb[0].mxu0 %v310
    %v437 = vpop.f32.mrb[0].mxu0
    %v438 = vadd.f32 0.0, %v437
    %v439 = vpop.f32.mrb[0].mxu0
    %440 = vmatprep.mubr.f32.mxu0 0.0
    %441 = vmatmul.mubr.f32.gmra.mrb[0].mxu0 %v313
    %v442 = vpop.f32.mrb[0].mxu0
    %v443 = vadd.f32 0.0, %v442
    %v444 = vpop.f32.mrb[0].mxu0
    %445 = vmatprep.mubr.f32.mxu0 0.0
    %446 = vmatmul.mubr.f32.gmra.mrb[0].mxu0 %v316
    %v447 = vpop.f32.mrb[0].mxu0
    %v448 = vadd.f32 0.0, %v447
    %v449 = vpop.f32.mrb[0].mxu0
    %450 = vmatprep.mubr.f32.mxu0 0.0
    %451 = vmatmul.mubr.f32.gmra.mrb[0].mxu0 %v319
    %v452 = vpop.f32.mrb[0].mxu0
    %v453 = vadd.f32 0.0, %v452
    %v454 = vpop.f32.mrb[0].mxu0
    %455 = vmatprep.mubr.f32.mxu0 0.0
    %456 = vmatmul.mubr.f32.gmra.mrb[0].mxu0 %v322
    %v457 = vpop.f32.mrb[0].mxu0
    %v458 = vadd.f32 0.0, %v457
    %v459 = vpop.f32.mrb[0].mxu0
    %460 = vmatprep.mubr.f32.mxu0 0.0
    %461 = vmatmul.mubr.f32.gmra.mrb[0].mxu0 %v325
    %v462 = vpop.f32.mrb[0].mxu0
    %v463 = vadd.f32 0.0, %v462
    %v464 = vpop.f32.mrb[0].mxu0
    %465 = vmatprep.mubr.f32.mxu0 0.0
    %466 = vmatmul.mubr.f32.gmra.mrb[0].mxu0 %v328
    %v467 = vpop.f32.mrb[0].mxu0
    %v468 = vadd.f32 0.0, %v467
    %v469 = vpop.f32.mrb[0].mxu0
    %470 = vmatprep.mubr.f32.mxu0 0.0
    %471 = vmatmul.mubr.f32.gmra.mrb[0].mxu0 %v331
    %v472 = vpop.f32.mrb[0].mxu0
    %v473 = vadd.f32 0.0, %v472
    %v474 = vpop.f32.mrb[0].mxu0
    %475 = vmatprep.mubr.f32.mxu0 0.0
    %476 = vmatmul.mubr.f32.gmra.mrb[0].mxu0 %v334
    %v477 = vpop.f32.mrb[0].mxu0
    %v478 = vadd.f32 0.0, %v477
    %v479 = vpop.f32.mrb[0].mxu0
    %480 = vdwg.mxu0
    %s481 = sld [smem:[#allocation11]]
    %s482 = sld [smem:[#allocation11 + $0x1]]
    %s483 = sld [smem:[#allocation11 + $0x2]]
    %s484 = sld [smem:[#allocation11 + $0x3]]
    %s485 = smul.f32 %s481, 0.54
    %v486 = vstv %s485
    %v487 = vrcp.pop %v486
    %s488 = vtos %v487
    %v489 = vstv %s481
    %v490 = vrcp.pop %v489
    %s491 = vtos %v490
    %v492 = vstv %s482
    %v493 = vrcp.pop %v492
    %s494 = vtos %v493
    %v495 = vld [vmem:[%s0] sm:$0xff]
    %v496 = vld [vmem:[%s0 + $0x8] sm:$0xff]
    %s497 = scalar_lea.vmem %s0, 16
    %v498 = vld [vmem:[%s497] sm:$0xff]
    %v499 = vld [vmem:[%s497 + $0x8] sm:$0xff]
    %v500 = vld [vmem:[%s1] sm:$0xff]
    %v501 = vld [vmem:[%s1 + $0x8] sm:$0xff]
    %vm502 = vcmp.eq.f32.partialorder %v500, 1.0
    %vm503 = vcmp.eq.f32.partialorder %v501, 1.0
    %v504 = vld [vmem:[#allocation2] sm:$0xff]
    %v505 = vld [vmem:[#allocation2 + $0x8] sm:$0xff]
    %v506 = vld [vmem:[#allocation5] sm:$0xff]
    %v507 = vld [vmem:[#allocation5 + $0x8] sm:$0xff]
    %vm508 = vcmp.eq.f32.partialorder %v506, 1.0
    %vm509 = vcmp.eq.f32.partialorder %v507, 1.0
    %v510 = vld [vmem:[#allocation7] sm:$0xff]
    %v511 = vld [vmem:[#allocation7 + $0x8] sm:$0xff]
    %v512 = vld [vmem:[#allocation8] sm:$0xff]
    %v513 = vld [vmem:[#allocation8 + $0x8] sm:$0xff]
    %vm514 = vcmp.eq.f32.partialorder %v512, 1.0
    %vm515 = vcmp.eq.f32.partialorder %v513, 1.0
    %v516 = vsel %vm502, 1, 0
    %v517 = vsel %vm503, 1, 0
    %v518 = vcvt.s32.f32 %v516
    %v519 = vcvt.s32.f32 %v517
    %v520 = vsel %vm508, 1, 0
    %v521 = vsel %vm509, 1, 0
    %v522 = vcvt.s32.f32 %v520
    %v523 = vcvt.s32.f32 %v521
    %v524 = vsel %vm514, 1, 0
    %v525 = vsel %vm515, 1, 0
    %v526 = vcvt.s32.f32 %v524
    %v527 = vcvt.s32.f32 %v525
    %v528 = vmul.f32 %v403, 128.0
    %v529 = vmul.f32 %v408, 128.0
    %vm530 = vcmp.gt.f32.partialorder %v528, 0.0
    %vm531 = vcmp.gt.f32.partialorder %v529, 0.0
    %v532 = vsel %vm530, 0.0, 1.0
    %v533 = vsel %vm531, 0.0, 1.0
    %v534 = vadd.f32 %v528, %v532
    %v535 = vadd.f32 %v529, %v533
    %v536 = vrcp.pop %v534
    %v537 = vrcp.pop %v535
    %v538 = vmul.f32 %v534, %v536
    %v539 = vmul.f32 %v535, %v537
    %v540 = vsub.f32 2.0, %v538
    %v541 = vsub.f32 2.0, %v539
    %v542 = vmul.f32 %v536, %v540
    %v543 = vmul.f32 %v537, %v541
    %v544 = vstv %s485
    %v545 = vmul.f32 %v544, %v542
    %v546 = vmul.f32 %v544, %v543
    %v547 = vmax.f32 %v545, 0.001
    %v548 = vmax.f32 %v546, 0.001
    %v549 = vmin.f32 %v547, 80.0
    %v550 = vmin.f32 %v548, 80.0
    %vm551 = vcmp.gt.f32.partialorder %v504, 0.0
    %vm552 = vcmp.gt.f32.partialorder %v505, 0.0
    %v553 = vsel %vm551, 0.0, 1.0
    %v554 = vsel %vm552, 0.0, 1.0
    %v555 = vadd.f32 %v504, %v553
    %v556 = vadd.f32 %v505, %v554
    %v557 = vrcp.pop %v555
    %v558 = vrcp.pop %v556
    %v559 = vmul.f32 %v555, %v557
    %v560 = vmul.f32 %v556, %v558
    %v561 = vsub.f32 2.0, %v559
    %v562 = vsub.f32 2.0, %v560
    %v563 = vmul.f32 %v557, %v561
    %v564 = vmul.f32 %v558, %v562
    %v565 = vmul.f32 %v544, %v563
    %v566 = vmul.f32 %v544, %v564
    %v567 = vstv %s488
    %v568 = vmul.f32 %v555, %v567
    %v569 = vmul.f32 %v556, %v567
    %v570 = vsub.f32 %v504, %v528
    %v571 = vsub.f32 %v505, %v529
    %v572 = vand.u32 2147483647, %v570
    %v573 = vand.u32 2147483647, %v571
    %v574 = vmul.f32 %v572, %v522
    %v575 = vmul.f32 %v573, %v523
    %vm576 = vcmp.gt.f32.partialorder %v574, 3.0
    %vm577 = vcmp.gt.f32.partialorder %v575, 3.0
    %vm578 = vmand %vm508, %vm576
    %vm579 = vmand %vm509, %vm577
    %v580 = vmul.f32 %v504, 0.05
    %v581 = vmul.f32 %v505, 0.05
    %vm582 = vcmp.gt.f32.partialorder %v574, %v580
    %vm583 = vcmp.gt.f32.partialorder %v575, %v581
    %vm584 = vmand %vm578, %vm582
    %vm585 = vmand %vm579, %vm583
    %v586 = vsub.f32 %v565, %v549
    %v587 = vsub.f32 %v566, %v550
    %v588 = vsel %vm584, 1, 0
    %v589 = vsel %vm585, 1, 0
    %v590 = vcvt.s32.f32 %v588
    %v591 = vcvt.s32.f32 %v589
    %v592 = vadd.f32 %v590, %v591
    %v593 = vrot.slane %v592, 4
    %v594 = vadd.f32 %v592, %v593
    %v595 = vrot.slane %v594, 2
    %v596 = vadd.f32 %v594, %v595
    %v597 = vrot.slane %v596, 1
    %v598 = vadd.f32 %v596, %v597
    %v599 = vadd.f32 %v598, 0.0
    %v600 = vadd.f32 %v522, %v523
    %v601 = vrot.slane %v600, 4
    %v602 = vadd.f32 %v600, %v601
    %v603 = vrot.slane %v602, 2
    %v604 = vadd.f32 %v602, %v603
    %v605 = vrot.slane %v604, 1
    %v606 = vadd.f32 %v604, %v605
    %v607 = vadd.f32 %v606, 0.0
    %v608 = vand.u32 2147483647, %v586
    %v609 = vand.u32 2147483647, %v587
    %v610 = vmul.f32 %v608, %v568
    %v611 = vmul.f32 %v609, %v569
    %v612 = vmul.f32 %v610, %v522
    %v613 = vmul.f32 %v611, %v523
    %v614 = vadd.f32 %v612, %v613
    %v615 = vrot.slane %v614, 4
    %v616 = vadd.f32 %v614, %v615
    %v617 = vrot.slane %v616, 2
    %v618 = vadd.f32 %v616, %v617
    %v619 = vrot.slane %v618, 1
    %v620 = vadd.f32 %v618, %v619
    %v621 = vadd.f32 %v620, 0.0
    %v622 = vmul.f32 %v586, %v586
    %v623 = vmul.f32 %v587, %v587
    %v624 = vmul.f32 %v622, %v568
    %v625 = vmul.f32 %v623, %v569
    %v626 = vmul.f32 %v624, %v522
    %v627 = vmul.f32 %v625, %v523
    %v628 = vadd.f32 %v626, %v627
    %v629 = vrot.slane %v628, 4
    %v630 = vadd.f32 %v628, %v629
    %v631 = vrot.slane %v630, 2
    %v632 = vadd.f32 %v630, %v631
    %v633 = vrot.slane %v632, 1
    %v634 = vadd.f32 %v632, %v633
    %v635 = vadd.f32 %v634, 0.0
    %v636 = vadd.f32 %v549, %v433
    %v637 = vadd.f32 %v550, %v438
    %v638 = vstv %s483
    %v639 = vsub.f32 %v120, %v638
    %v640 = vstv %s491
    %v641 = vmul.f32 %v639, %v640
    %v642 = vmul.f32 %v641, %v549
    %v643 = vmul.f32 %v641, %v550
    %v644 = vadd.f32 %v642, %v413
    %v645 = vadd.f32 %v643, %v418
    %v646 = vstv %s484
    %v647 = vsub.f32 %v124, %v646
    %v648 = vsub.f32 %v125, %v646
    %v649 = vstv %s494
    %v650 = vmul.f32 %v647, %v649
    %v651 = vmul.f32 %v648, %v649
    %v652 = vmul.f32 %v650, %v549
    %v653 = vmul.f32 %v651, %v550
    %v654 = vadd.f32 %v652, %v423
    %v655 = vadd.f32 %v653, %v428
    %v656 = vstv %s481
    %v657 = vmul.f32 %v656, %v644
    %v658 = vmul.f32 %v656, %v645
    %v659 = vmul.f32 %v638, %v636
    %v660 = vmul.f32 %v638, %v637
    %v661 = vadd.f32 %v657, %v659
    %v662 = vadd.f32 %v658, %v660
    %v663 = vstv %s482
    %v664 = vmul.f32 %v663, %v654
    %v665 = vmul.f32 %v663, %v655
    %v666 = vmul.f32 %v646, %v636
    %v667 = vmul.f32 %v646, %v637
    %v668 = vadd.f32 %v664, %v666
    %v669 = vadd.f32 %v665, %v667
    %v670 = vadd.f32 %v636, 1e-08
    %v671 = vadd.f32 %v637, 1e-08
    %v672 = vrcp.pop %v670
    %v673 = vrcp.pop %v671
    %v674 = vmul.f32 %v670, %v672
    %v675 = vmul.f32 %v671, %v673
    %v676 = vsub.f32 2.0, %v674
    %v677 = vsub.f32 2.0, %v675
    %v678 = vmul.f32 %v672, %v676
    %v679 = vmul.f32 %v673, %v677
    %v680 = vmul.f32 %v661, %v678
    %v681 = vmul.f32 %v662, %v679
    %v682 = vsub.f32 %v680, %v120
    %v683 = vsub.f32 %v681, %v120
    %v684 = vmul.f32 %v668, %v678
    %v685 = vmul.f32 %v669, %v679
    %v686 = vsub.f32 %v684, %v124
    %v687 = vsub.f32 %v685, %v125
    %v688 = vsub.f32 %v495, %v682
    %v689 = vsub.f32 %v496, %v683
    %v690 = vsub.f32 %v498, %v686
    %v691 = vsub.f32 %v499, %v687
    %v692 = vmul.f32 %v688, %v688
    %v693 = vmul.f32 %v689, %v689
    %v694 = vmul.f32 %v690, %v690
    %v695 = vmul.f32 %v691, %v691
    %v696 = vadd.f32 %v692, %v694
    %v697 = vadd.f32 %v693, %v695
    %v698 = vrsqrt.pop %v696
    %v699 = vmul.f32 %v696, %v698
    %vm700 = vcmp.eq.f32.partialorder %v696, inf
    %v701 = vsel %vm700, %v696, %v699
    %vm702 = vcmp.eq.f32.partialorder %v696, 0.0
    %v703 = vand.u32 %v696, 2147483648
    %v704 = vsel %vm702, %v703, %v701
    %v705 = vrsqrt.pop %v697
    %v706 = vmul.f32 %v697, %v705
    %vm707 = vcmp.eq.f32.partialorder %v697, inf
    %v708 = vsel %vm707, %v697, %v706
    %vm709 = vcmp.eq.f32.partialorder %v697, 0.0
    %v710 = vand.u32 %v697, 2147483648
    %v711 = vsel %vm709, %v710, %v708
    %v712 = vmul.f32 %v704, %v518
    %v713 = vmul.f32 %v711, %v519
    %v714 = vmul.f32 %v495, %v495
    %v715 = vmul.f32 %v496, %v496
    %v716 = vmul.f32 %v498, %v498
    %v717 = vmul.f32 %v499, %v499
    %v718 = vadd.f32 %v714, %v716
    %v719 = vadd.f32 %v715, %v717
    %v720 = vrsqrt.pop %v718
    %v721 = vmul.f32 %v718, %v720
    %vm722 = vcmp.eq.f32.partialorder %v718, inf
    %v723 = vsel %vm722, %v718, %v721
    %vm724 = vcmp.eq.f32.partialorder %v718, 0.0
    %v725 = vand.u32 %v718, 2147483648
    %v726 = vsel %vm724, %v725, %v723
    %v727 = vrsqrt.pop %v719
    %v728 = vmul.f32 %v719, %v727
    %vm729 = vcmp.eq.f32.partialorder %v719, inf
    %v730 = vsel %vm729, %v719, %v728
    %vm731 = vcmp.eq.f32.partialorder %v719, 0.0
    %v732 = vand.u32 %v719, 2147483648
    %v733 = vsel %vm731, %v732, %v730
    %v734 = vadd.f32 %v726, 1e-08
    %v735 = vadd.f32 %v733, 1e-08
    %vm736 = vcmp.gt.f32.partialorder %v712, 3.0
    %vm737 = vcmp.gt.f32.partialorder %v713, 3.0
    %vm738 = vmand %vm502, %vm736
    %vm739 = vmand %vm503, %vm737
    %v740 = vmul.f32 %v734, 0.05
    %v741 = vmul.f32 %v735, 0.05
    %vm742 = vcmp.gt.f32.partialorder %v712, %v740
    %vm743 = vcmp.gt.f32.partialorder %v713, %v741
    %vm744 = vmand %vm738, %vm742
    %vm745 = vmand %vm739, %vm743
    %v746 = vadd.f32 %v712, %v713
    %v747 = vrot.slane %v746, 4
    %v748 = vadd.f32 %v746, %v747
    %v749 = vrot.slane %v748, 2
    %v750 = vadd.f32 %v748, %v749
    %v751 = vrot.slane %v750, 1
    %v752 = vadd.f32 %v750, %v751
    %v753 = vadd.f32 %v752, 0.0
    %v754 = vsel %vm744, 1, 0
    %v755 = vsel %vm745, 1, 0
    %v756 = vcvt.s32.f32 %v754
    %v757 = vcvt.s32.f32 %v755
    %v758 = vadd.f32 %v756, %v757
    %v759 = vrot.slane %v758, 4
    %v760 = vadd.f32 %v758, %v759
    %v761 = vrot.slane %v760, 2
    %v762 = vadd.f32 %v760, %v761
    %v763 = vrot.slane %v762, 1
    %v764 = vadd.f32 %v762, %v763
    %v765 = vadd.f32 %v764, 0.0
    %v766 = vrcp.pop %v636
    %v767 = vrcp.pop %v637
    %v768 = vmul.f32 %v636, %v766
    %v769 = vmul.f32 %v637, %v767
    %v770 = vsub.f32 2.0, %v768
    %v771 = vsub.f32 2.0, %v769
    %v772 = vmul.f32 %v766, %v770
    %v773 = vmul.f32 %v767, %v771
    %v774 = vmul.f32 %v544, %v772
    %v775 = vmul.f32 %v544, %v773
    %v776 = vsub.f32 %v510, %v774
    %v777 = vsub.f32 %v511, %v775
    %v778 = vand.u32 2147483647, %v776
    %v779 = vand.u32 2147483647, %v777
    %v780 = vmul.f32 %v778, %v526
    %v781 = vmul.f32 %v779, %v527
    %vm782 = vcmp.gt.f32.partialorder %v780, 3.0
    %vm783 = vcmp.gt.f32.partialorder %v781, 3.0
    %vm784 = vmand %vm514, %vm782
    %vm785 = vmand %vm515, %vm783
    %v786 = vmul.f32 %v510, 0.05
    %v787 = vmul.f32 %v511, 0.05
    %vm788 = vcmp.gt.f32.partialorder %v780, %v786
    %vm789 = vcmp.gt.f32.partialorder %v781, %v787
    %vm790 = vmand %vm784, %vm788
    %vm791 = vmand %vm785, %vm789
    %v792 = vsel %vm790, 1, 0
    %v793 = vsel %vm791, 1, 0
    %v794 = vcvt.s32.f32 %v792
    %v795 = vcvt.s32.f32 %v793
    %v796 = vadd.f32 %v794, %v795
    %v797 = vrot.slane %v796, 4
    %v798 = vadd.f32 %v796, %v797
    %v799 = vrot.slane %v798, 2
    %v800 = vadd.f32 %v798, %v799
    %v801 = vrot.slane %v800, 1
    %v802 = vadd.f32 %v800, %v801
    %v803 = vadd.f32 %v802, 0.0
    %v804 = vmul.f32 %v518, %v522
    %v805 = vmul.f32 %v519, %v523
    %v806 = vmul.f32 %v804, %v526
    %v807 = vmul.f32 %v805, %v527
    %vm808 = vmor %vm744, %vm584
    %vm809 = vmor %vm745, %vm585
    %vm810 = vmor %vm808, %vm790
    %vm811 = vmor %vm809, %vm791
    %v812 = vsel %vm810, 1, 0
    %v813 = vsel %vm811, 1, 0
    %v814 = vcvt.s32.f32 %v812
    %v815 = vcvt.s32.f32 %v813
    %v816 = vmul.f32 %v814, %v806
    %v817 = vmul.f32 %v815, %v807
    %v818 = vadd.f32 %v806, %v807
    %v819 = vrot.slane %v818, 4
    %v820 = vadd.f32 %v818, %v819
    %v821 = vrot.slane %v820, 2
    %v822 = vadd.f32 %v820, %v821
    %v823 = vrot.slane %v822, 1
    %v824 = vadd.f32 %v822, %v823
    %v825 = vadd.f32 %v824, 0.0
    %v826 = vadd.f32 %v816, %v817
    %v827 = vrot.slane %v826, 4
    %v828 = vadd.f32 %v826, %v827
    %v829 = vrot.slane %v828, 2
    %v830 = vadd.f32 %v828, %v829
    %v831 = vrot.slane %v830, 1
    %v832 = vadd.f32 %v830, %v831
    %v833 = vadd.f32 %v832, 0.0
    %834 = vst [vmem:[%s10] sm:$0xff] %v806
    %835 = vst [vmem:[%s10 + $0x8] sm:$0xff] %v807
    %s836 = scalar_lea.vmem %s10, 16
    %837 = vst [vmem:[%s836] sm:$0xff] %v528
    %838 = vst [vmem:[%s836 + $0x8] sm:$0xff] %v529
    %s839 = scalar_lea.vmem %s10, 32
    %840 = vst [vmem:[%s839] sm:$0xff] %v549
    %841 = vst [vmem:[%s839 + $0x8] sm:$0xff] %v550
    %s842 = scalar_lea.vmem %s10, 48
    %843 = vst [vmem:[%s842] sm:$0xff] %v682
    %844 = vst [vmem:[%s842 + $0x8] sm:$0xff] %v683
    %s845 = scalar_lea.vmem %s10, 64
    %846 = vst [vmem:[%s845] sm:$0xff] %v686
    %847 = vst [vmem:[%s845 + $0x8] sm:$0xff] %v687
    %s848 = scalar_lea.vmem %s10, 80
    %849 = vst [vmem:[%s848] sm:$0xff] %v774
    %850 = vst [vmem:[%s848 + $0x8] sm:$0xff] %v775
    %s851 = scalar_lea.vmem %s10, 96
    %852 = vst [vmem:[%s851] sm:$0xff] %v636
    %853 = vst [vmem:[%s851 + $0x8] sm:$0xff] %v637
    %s854 = sld [smem:[#allocation11 + $0x4]]
    %s855 = sld [smem:[#allocation11 + $0x5]]
    %s856 = sld [smem:[#allocation11 + $0x6]]
    %s857 = sld [smem:[#allocation11 + $0x7]]
    %s858 = smul.f32 %s854, 0.54
    %v859 = vstv %s858
    %v860 = vrcp.pop %v859
    %s861 = vtos %v860
    %v862 = vstv %s854
    %v863 = vrcp.pop %v862
    %s864 = vtos %v863
    %v865 = vstv %s855
    %v866 = vrcp.pop %v865
    %s867 = vtos %v866
    %s868 = scalar_lea.vmem %s0, 32
    %v869 = vld [vmem:[%s868] sm:$0xff]
    %v870 = vld [vmem:[%s868 + $0x8] sm:$0xff]
    %s871 = scalar_lea.vmem %s0, 48
    %v872 = vld [vmem:[%s871] sm:$0xff]
    %v873 = vld [vmem:[%s871 + $0x8] sm:$0xff]
    %s874 = scalar_lea.vmem %s1, 16
    %v875 = vld [vmem:[%s874] sm:$0xff]
    %v876 = vld [vmem:[%s874 + $0x8] sm:$0xff]
    %vm877 = vcmp.eq.f32.partialorder %v875, 1.0
    %vm878 = vcmp.eq.f32.partialorder %v876, 1.0
    %s879 = scalar_lea.vmem [#allocation2], 16
    %v880 = vld [vmem:[%s879] sm:$0xff]
    %v881 = vld [vmem:[%s879 + $0x8] sm:$0xff]
    %s882 = scalar_lea.vmem [#allocation5], 16
    %v883 = vld [vmem:[%s882] sm:$0xff]
    %v884 = vld [vmem:[%s882 + $0x8] sm:$0xff]
    %vm885 = vcmp.eq.f32.partialorder %v883, 1.0
    %vm886 = vcmp.eq.f32.partialorder %v884, 1.0
    %s887 = scalar_lea.vmem [#allocation7], 16
    %v888 = vld [vmem:[%s887] sm:$0xff]
    %v889 = vld [vmem:[%s887 + $0x8] sm:$0xff]
    %s890 = scalar_lea.vmem [#allocation8], 16
    %v891 = vld [vmem:[%s890] sm:$0xff]
    %v892 = vld [vmem:[%s890 + $0x8] sm:$0xff]
    %vm893 = vcmp.eq.f32.partialorder %v891, 1.0
    %vm894 = vcmp.eq.f32.partialorder %v892, 1.0
    %v895 = vsel %vm877, 1, 0
    %v896 = vsel %vm878, 1, 0
    %v897 = vcvt.s32.f32 %v895
    %v898 = vcvt.s32.f32 %v896
    %v899 = vsel %vm885, 1, 0
    %v900 = vsel %vm886, 1, 0
    %v901 = vcvt.s32.f32 %v899
    %v902 = vcvt.s32.f32 %v900
    %v903 = vsel %vm893, 1, 0
    %v904 = vsel %vm894, 1, 0
    %v905 = vcvt.s32.f32 %v903
    %v906 = vcvt.s32.f32 %v904
    %v907 = vmul.f32 %v443, 128.0
    %v908 = vmul.f32 %v448, 128.0
    %vm909 = vcmp.gt.f32.partialorder %v907, 0.0
    %vm910 = vcmp.gt.f32.partialorder %v908, 0.0
    %v911 = vsel %vm909, 0.0, 1.0
    %v912 = vsel %vm910, 0.0, 1.0
    %v913 = vadd.f32 %v907, %v911
    %v914 = vadd.f32 %v908, %v912
    %v915 = vrcp.pop %v913
    %v916 = vrcp.pop %v914
    %v917 = vmul.f32 %v913, %v915
    %v918 = vmul.f32 %v914, %v916
    %v919 = vsub.f32 2.0, %v917
    %v920 = vsub.f32 2.0, %v918
    %v921 = vmul.f32 %v915, %v919
    %v922 = vmul.f32 %v916, %v920
    %v923 = vstv %s858
    %v924 = vmul.f32 %v923, %v921
    %v925 = vmul.f32 %v923, %v922
    %v926 = vmax.f32 %v924, 0.001
    %v927 = vmax.f32 %v925, 0.001
    %v928 = vmin.f32 %v926, 80.0
    %v929 = vmin.f32 %v927, 80.0
    %vm930 = vcmp.gt.f32.partialorder %v880, 0.0
    %vm931 = vcmp.gt.f32.partialorder %v881, 0.0
    %v932 = vsel %vm930, 0.0, 1.0
    %v933 = vsel %vm931, 0.0, 1.0
    %v934 = vadd.f32 %v880, %v932
    %v935 = vadd.f32 %v881, %v933
    %v936 = vrcp.pop %v934
    %v937 = vrcp.pop %v935
    %v938 = vmul.f32 %v934, %v936
    %v939 = vmul.f32 %v935, %v937
    %v940 = vsub.f32 2.0, %v938
    %v941 = vsub.f32 2.0, %v939
    %v942 = vmul.f32 %v936, %v940
    %v943 = vmul.f32 %v937, %v941
    %v944 = vmul.f32 %v923, %v942
    %v945 = vmul.f32 %v923, %v943
    %v946 = vstv %s861
    %v947 = vmul.f32 %v934, %v946
    %v948 = vmul.f32 %v935, %v946
    %v949 = vsub.f32 %v880, %v907
    %v950 = vsub.f32 %v881, %v908
    %v951 = vand.u32 2147483647, %v949
    %v952 = vand.u32 2147483647, %v950
    %v953 = vmul.f32 %v951, %v901
    %v954 = vmul.f32 %v952, %v902
    %vm955 = vcmp.gt.f32.partialorder %v953, 3.0
    %vm956 = vcmp.gt.f32.partialorder %v954, 3.0
    %vm957 = vmand %vm885, %vm955
    %vm958 = vmand %vm886, %vm956
    %v959 = vmul.f32 %v880, 0.05
    %v960 = vmul.f32 %v881, 0.05
    %vm961 = vcmp.gt.f32.partialorder %v953, %v959
    %vm962 = vcmp.gt.f32.partialorder %v954, %v960
    %vm963 = vmand %vm957, %vm961
    %vm964 = vmand %vm958, %vm962
    %v965 = vsub.f32 %v944, %v928
    %v966 = vsub.f32 %v945, %v929
    %v967 = vsel %vm963, 1, 0
    %v968 = vsel %vm964, 1, 0
    %v969 = vcvt.s32.f32 %v967
    %v970 = vcvt.s32.f32 %v968
    %v971 = vadd.f32 %v969, %v970
    %v972 = vrot.slane %v971, 4
    %v973 = vadd.f32 %v971, %v972
    %v974 = vrot.slane %v973, 2
    %v975 = vadd.f32 %v973, %v974
    %v976 = vrot.slane %v975, 1
    %v977 = vadd.f32 %v975, %v976
    %v978 = vadd.f32 %v599, %v977
    %v979 = vadd.f32 %v901, %v902
    %v980 = vrot.slane %v979, 4
    %v981 = vadd.f32 %v979, %v980
    %v982 = vrot.slane %v981, 2
    %v983 = vadd.f32 %v981, %v982
    %v984 = vrot.slane %v983, 1
    %v985 = vadd.f32 %v983, %v984
    %v986 = vadd.f32 %v607, %v985
    %v987 = vand.u32 2147483647, %v965
    %v988 = vand.u32 2147483647, %v966
    %v989 = vmul.f32 %v987, %v947
    %v990 = vmul.f32 %v988, %v948
    %v991 = vmul.f32 %v989, %v901
    %v992 = vmul.f32 %v990, %v902
    %v993 = vadd.f32 %v991, %v992
    %v994 = vrot.slane %v993, 4
    %v995 = vadd.f32 %v993, %v994
    %v996 = vrot.slane %v995, 2
    %v997 = vadd.f32 %v995, %v996
    %v998 = vrot.slane %v997, 1
    %v999 = vadd.f32 %v997, %v998
    %v1000 = vadd.f32 %v621, %v999
    %v1001 = vmul.f32 %v965, %v965
    %v1002 = vmul.f32 %v966, %v966
    %v1003 = vmul.f32 %v1001, %v947
    %v1004 = vmul.f32 %v1002, %v948
    %v1005 = vmul.f32 %v1003, %v901
    %v1006 = vmul.f32 %v1004, %v902
    %v1007 = vadd.f32 %v1005, %v1006
    %v1008 = vrot.slane %v1007, 4
    %v1009 = vadd.f32 %v1007, %v1008
    %v1010 = vrot.slane %v1009, 2
    %v1011 = vadd.f32 %v1009, %v1010
    %v1012 = vrot.slane %v1011, 1
    %v1013 = vadd.f32 %v1011, %v1012
    %v1014 = vadd.f32 %v635, %v1013
    %v1015 = vadd.f32 %v928, %v473
    %v1016 = vadd.f32 %v929, %v478
    %v1017 = vstv %s856
    %v1018 = vsub.f32 %v120, %v1017
    %v1019 = vstv %s864
    %v1020 = vmul.f32 %v1018, %v1019
    %v1021 = vmul.f32 %v1020, %v928
    %v1022 = vmul.f32 %v1020, %v929
    %v1023 = vadd.f32 %v1021, %v453
    %v1024 = vadd.f32 %v1022, %v458
    %v1025 = vstv %s857
    %v1026 = vsub.f32 %v124, %v1025
    %v1027 = vsub.f32 %v125, %v1025
    %v1028 = vstv %s867
    %v1029 = vmul.f32 %v1026, %v1028
    %v1030 = vmul.f32 %v1027, %v1028
    %v1031 = vmul.f32 %v1029, %v928
    %v1032 = vmul.f32 %v1030, %v929
    %v1033 = vadd.f32 %v1031, %v463
    %v1034 = vadd.f32 %v1032, %v468
    %v1035 = vstv %s854
    %v1036 = vmul.f32 %v1035, %v1023
    %v1037 = vmul.f32 %v1035, %v1024
    %v1038 = vmul.f32 %v1017, %v1015
    %v1039 = vmul.f32 %v1017, %v1016
    %v1040 = vadd.f32 %v1036, %v1038
    %v1041 = vadd.f32 %v1037, %v1039
    %v1042 = vstv %s855
    %v1043 = vmul.f32 %v1042, %v1033
    %v1044 = vmul.f32 %v1042, %v1034
    %v1045 = vmul.f32 %v1025, %v1015
    %v1046 = vmul.f32 %v1025, %v1016
    %v1047 = vadd.f32 %v1043, %v1045
    %v1048 = vadd.f32 %v1044, %v1046
    %v1049 = vadd.f32 %v1015, 1e-08
    %v1050 = vadd.f32 %v1016, 1e-08
    %v1051 = vrcp.pop %v1049
    %v1052 = vrcp.pop %v1050
    %v1053 = vmul.f32 %v1049, %v1051
    %v1054 = vmul.f32 %v1050, %v1052
    %v1055 = vsub.f32 2.0, %v1053
    %v1056 = vsub.f32 2.0, %v1054
    %v1057 = vmul.f32 %v1051, %v1055
    %v1058 = vmul.f32 %v1052, %v1056
    %v1059 = vmul.f32 %v1040, %v1057
    %v1060 = vmul.f32 %v1041, %v1058
    %v1061 = vsub.f32 %v1059, %v120
    %v1062 = vsub.f32 %v1060, %v120
    %v1063 = vmul.f32 %v1047, %v1057
    %v1064 = vmul.f32 %v1048, %v1058
    %v1065 = vsub.f32 %v1063, %v124
    %v1066 = vsub.f32 %v1064, %v125
    %v1067 = vsub.f32 %v869, %v1061
    %v1068 = vsub.f32 %v870, %v1062
    %v1069 = vsub.f32 %v872, %v1065
    %v1070 = vsub.f32 %v873, %v1066
    %v1071 = vmul.f32 %v1067, %v1067
    %v1072 = vmul.f32 %v1068, %v1068
    %v1073 = vmul.f32 %v1069, %v1069
    %v1074 = vmul.f32 %v1070, %v1070
    %v1075 = vadd.f32 %v1071, %v1073
    %v1076 = vadd.f32 %v1072, %v1074
    %v1077 = vrsqrt.pop %v1075
    %v1078 = vmul.f32 %v1075, %v1077
    %vm1079 = vcmp.eq.f32.partialorder %v1075, inf
    %v1080 = vsel %vm1079, %v1075, %v1078
    %vm1081 = vcmp.eq.f32.partialorder %v1075, 0.0
    %v1082 = vand.u32 %v1075, 2147483648
    %v1083 = vsel %vm1081, %v1082, %v1080
    %v1084 = vrsqrt.pop %v1076
    %v1085 = vmul.f32 %v1076, %v1084
    %vm1086 = vcmp.eq.f32.partialorder %v1076, inf
    %v1087 = vsel %vm1086, %v1076, %v1085
    %vm1088 = vcmp.eq.f32.partialorder %v1076, 0.0
    %v1089 = vand.u32 %v1076, 2147483648
    %v1090 = vsel %vm1088, %v1089, %v1087
    %v1091 = vmul.f32 %v1083, %v897
    %v1092 = vmul.f32 %v1090, %v898
    %v1093 = vmul.f32 %v869, %v869
    %v1094 = vmul.f32 %v870, %v870
    %v1095 = vmul.f32 %v872, %v872
    %v1096 = vmul.f32 %v873, %v873
    %v1097 = vadd.f32 %v1093, %v1095
    %v1098 = vadd.f32 %v1094, %v1096
    %v1099 = vrsqrt.pop %v1097
    %v1100 = vmul.f32 %v1097, %v1099
    %vm1101 = vcmp.eq.f32.partialorder %v1097, inf
    %v1102 = vsel %vm1101, %v1097, %v1100
    %vm1103 = vcmp.eq.f32.partialorder %v1097, 0.0
    %v1104 = vand.u32 %v1097, 2147483648
    %v1105 = vsel %vm1103, %v1104, %v1102
    %v1106 = vrsqrt.pop %v1098
    %v1107 = vmul.f32 %v1098, %v1106
    %vm1108 = vcmp.eq.f32.partialorder %v1098, inf
    %v1109 = vsel %vm1108, %v1098, %v1107
    %vm1110 = vcmp.eq.f32.partialorder %v1098, 0.0
    %v1111 = vand.u32 %v1098, 2147483648
    %v1112 = vsel %vm1110, %v1111, %v1109
    %v1113 = vadd.f32 %v1105, 1e-08
    %v1114 = vadd.f32 %v1112, 1e-08
    %vm1115 = vcmp.gt.f32.partialorder %v1091, 3.0
    %vm1116 = vcmp.gt.f32.partialorder %v1092, 3.0
    %vm1117 = vmand %vm877, %vm1115
    %vm1118 = vmand %vm878, %vm1116
    %v1119 = vmul.f32 %v1113, 0.05
    %v1120 = vmul.f32 %v1114, 0.05
    %vm1121 = vcmp.gt.f32.partialorder %v1091, %v1119
    %vm1122 = vcmp.gt.f32.partialorder %v1092, %v1120
    %vm1123 = vmand %vm1117, %vm1121
    %vm1124 = vmand %vm1118, %vm1122
    %v1125 = vadd.f32 %v1091, %v1092
    %v1126 = vrot.slane %v1125, 4
    %v1127 = vadd.f32 %v1125, %v1126
    %v1128 = vrot.slane %v1127, 2
    %v1129 = vadd.f32 %v1127, %v1128
    %v1130 = vrot.slane %v1129, 1
    %v1131 = vadd.f32 %v1129, %v1130
    %v1132 = vadd.f32 %v753, %v1131
    %v1133 = vsel %vm1123, 1, 0
    %v1134 = vsel %vm1124, 1, 0
    %v1135 = vcvt.s32.f32 %v1133
    %v1136 = vcvt.s32.f32 %v1134
    %v1137 = vadd.f32 %v1135, %v1136
    %v1138 = vrot.slane %v1137, 4
    %v1139 = vadd.f32 %v1137, %v1138
    %v1140 = vrot.slane %v1139, 2
    %v1141 = vadd.f32 %v1139, %v1140
    %v1142 = vrot.slane %v1141, 1
    %v1143 = vadd.f32 %v1141, %v1142
    %v1144 = vadd.f32 %v765, %v1143
    %v1145 = vrcp.pop %v1015
    %v1146 = vrcp.pop %v1016
    %v1147 = vmul.f32 %v1015, %v1145
    %v1148 = vmul.f32 %v1016, %v1146
    %v1149 = vsub.f32 2.0, %v1147
    %v1150 = vsub.f32 2.0, %v1148
    %v1151 = vmul.f32 %v1145, %v1149
    %v1152 = vmul.f32 %v1146, %v1150
    %v1153 = vmul.f32 %v923, %v1151
    %v1154 = vmul.f32 %v923, %v1152
    %v1155 = vsub.f32 %v888, %v1153
    %v1156 = vsub.f32 %v889, %v1154
    %v1157 = vand.u32 2147483647, %v1155
    %v1158 = vand.u32 2147483647, %v1156
    %v1159 = vmul.f32 %v1157, %v905
    %v1160 = vmul.f32 %v1158, %v906
    %vm1161 = vcmp.gt.f32.partialorder %v1159, 3.0
    %vm1162 = vcmp.gt.f32.partialorder %v1160, 3.0
    %vm1163 = vmand %vm893, %vm1161
    %vm1164 = vmand %vm894, %vm1162
    %v1165 = vmul.f32 %v888, 0.05
    %v1166 = vmul.f32 %v889, 0.05
    %vm1167 = vcmp.gt.f32.partialorder %v1159, %v1165
    %vm1168 = vcmp.gt.f32.partialorder %v1160, %v1166
    %vm1169 = vmand %vm1163, %vm1167
    %vm1170 = vmand %vm1164, %vm1168
    %v1171 = vsel %vm1169, 1, 0
    %v1172 = vsel %vm1170, 1, 0
    %v1173 = vcvt.s32.f32 %v1171
    %v1174 = vcvt.s32.f32 %v1172
    %v1175 = vadd.f32 %v1173, %v1174
    %v1176 = vrot.slane %v1175, 4
    %v1177 = vadd.f32 %v1175, %v1176
    %v1178 = vrot.slane %v1177, 2
    %v1179 = vadd.f32 %v1177, %v1178
    %v1180 = vrot.slane %v1179, 1
    %v1181 = vadd.f32 %v1179, %v1180
    %v1182 = vadd.f32 %v803, %v1181
    %v1183 = vmul.f32 %v897, %v901
    %v1184 = vmul.f32 %v898, %v902
    %v1185 = vmul.f32 %v1183, %v905
    %v1186 = vmul.f32 %v1184, %v906
    %vm1187 = vmor %vm1123, %vm963
    %vm1188 = vmor %vm1124, %vm964
    %vm1189 = vmor %vm1187, %vm1169
    %vm1190 = vmor %vm1188, %vm1170
    %v1191 = vsel %vm1189, 1, 0
    %v1192 = vsel %vm1190, 1, 0
    %v1193 = vcvt.s32.f32 %v1191
    %v1194 = vcvt.s32.f32 %v1192
    %v1195 = vmul.f32 %v1193, %v1185
    %v1196 = vmul.f32 %v1194, %v1186
    %v1197 = vadd.f32 %v1185, %v1186
    %v1198 = vrot.slane %v1197, 4
    %v1199 = vadd.f32 %v1197, %v1198
    %v1200 = vrot.slane %v1199, 2
    %v1201 = vadd.f32 %v1199, %v1200
    %v1202 = vrot.slane %v1201, 1
    %v1203 = vadd.f32 %v1201, %v1202
    %v1204 = vadd.f32 %v825, %v1203
    %v1205 = vadd.f32 %v1195, %v1196
    %v1206 = vrot.slane %v1205, 4
    %v1207 = vadd.f32 %v1205, %v1206
    %v1208 = vrot.slane %v1207, 2
    %v1209 = vadd.f32 %v1207, %v1208
    %v1210 = vrot.slane %v1209, 1
    %v1211 = vadd.f32 %v1209, %v1210
    %v1212 = vadd.f32 %v833, %v1211
    %s1213 = scalar_lea.vmem %s10, 112
    %1214 = vst [vmem:[%s1213] sm:$0xff] %v1185
    %1215 = vst [vmem:[%s1213 + $0x8] sm:$0xff] %v1186
    %s1216 = scalar_lea.vmem %s10, 128
    %1217 = vst [vmem:[%s1216] sm:$0xff] %v907
    %1218 = vst [vmem:[%s1216 + $0x8] sm:$0xff] %v908
    %s1219 = scalar_lea.vmem %s10, 144
    %1220 = vst [vmem:[%s1219] sm:$0xff] %v928
    %1221 = vst [vmem:[%s1219 + $0x8] sm:$0xff] %v929
    %s1222 = scalar_lea.vmem %s10, 160
    %1223 = vst [vmem:[%s1222] sm:$0xff] %v1061
    %1224 = vst [vmem:[%s1222 + $0x8] sm:$0xff] %v1062
    %s1225 = scalar_lea.vmem %s10, 176
    %1226 = vst [vmem:[%s1225] sm:$0xff] %v1065
    %1227 = vst [vmem:[%s1225 + $0x8] sm:$0xff] %v1066
    %s1228 = scalar_lea.vmem %s10, 192
    %1229 = vst [vmem:[%s1228] sm:$0xff] %v1153
    %1230 = vst [vmem:[%s1228 + $0x8] sm:$0xff] %v1154
    %s1231 = scalar_lea.vmem %s10, 208
    %1232 = vst [vmem:[%s1231] sm:$0xff] %v1015
    %1233 = vst [vmem:[%s1231 + $0x8] sm:$0xff] %v1016
    %vm1234 = vcmask 1040384
    %v1235 = vsel %vm1234, %v1204, %v978
    %vm1236 = vcmask 1041408
    %v1237 = vsel %vm1236, %v1235, %v986
    %vm1238 = vcmask 1042432
    %v1239 = vsel %vm1238, %v1237, %v1000
    %vm1240 = vcmask 1043456
    %v1241 = vsel %vm1240, %v1239, %v1014
    %vm1242 = vcmask 1044480
    %v1243 = vsel %vm1242, %v1241, %v1132
    %vm1244 = vcmask 1045504
    %v1245 = vsel %vm1244, %v1243, %v1144
    %vm1246 = vcmask 1046528
    %v1247 = vsel %vm1246, %v1245, %v1182
    %v1248 = vsel %vm1234, %v1212, 0.0
    %1249 = vst [vmem:[%s11] sm:$0xff] %v1247
    %1250 = vst [vmem:[%s11 + $0x8] sm:$0xff] %v1248
    // Predicated region
    $region66: #{_run_kernel.1} parent=1 // pred_check
      _
    $region67: #{_run_kernel.1} parent=1 // pred_check_branch
      %1252 = sbr.rel (0) target = $region69
    $region68: #{_run_kernel.1} parent=1 // pred_region
      _
    $region69: #{_run_kernel.1} parent=1 // pred_fallthru
      _
    // Predicated region
    $region70: #{_run_kernel.1} parent=1 // pred_check
      _
    $region71: #{_run_kernel.1} parent=1 // pred_check_branch
      %1254 = sbr.rel (0) target = $region73
    $region72: #{_run_kernel.1} parent=1 // pred_region
      _
    $region73: #{_run_kernel.1} parent=1 // pred_fallthru
      _
    // Predicated region
    $region74: #{_run_kernel.1} parent=1 // pred_check
      _
    $region75: #{_run_kernel.1} parent=1 // pred_check_branch
      %1256 = sbr.rel (0) target = $region77
    $region76: #{_run_kernel.1} parent=1 // pred_region
      _
    $region77: #{_run_kernel.1} parent=1 // pred_fallthru
      _
    // Predicated region
    $region78: #{_run_kernel.1} parent=1 // pred_check
      _
    $region79: #{_run_kernel.1} parent=1 // pred_check_branch
      %1258 = sbr.rel (0) target = $region81
    $region80: #{_run_kernel.1} parent=1 // pred_region
      _
    $region81: #{_run_kernel.1} parent=1 // pred_fallthru
      _
    %1259 = vsyncpa [#allocation3], 1
    %1260 = vsyncpa [#allocation6], 1
    %1261 = vsyncpa [#allocation9], 1
    %1262 = vsyncpa [#allocation4], 1

</llo_original>
